<compile_context>
chip_gen: v6e
topology: v6e:2x2x1
jax: 0.10.0
libtpu: 0.0.40
codegen_flags: <defaults>
</compile_context>

<pallas_src>
import functools

import jax
import jax.numpy as jnp
from jax.experimental import pallas as pl
from jax.experimental.pallas import tpu as pltpu


# ------------------------------ tiling helper ------------------------------
def _pick_tile(dim, target, align):
    """Largest tile <= target that divides `dim` and respects TPU alignment.

    Falls back to the full dimension (always legal: block == array dim)."""
    if dim <= target:
        return dim
    t = (target // align) * align
    while t >= align:
        if dim % t == 0:
            return t
        t -= align
    return dim


# ------------------------- tiled linear (+fusions) --------------------------
def _linear_kernel(*refs, has_residual, activation):
    if has_residual:
        x_ref, w_ref, b_ref, r_ref, o_ref, acc_ref = refs
    else:
        x_ref, w_ref, b_ref, o_ref, acc_ref = refs
        r_ref = None

    k = pl.program_id(2)

    @pl.when(k == 0)
    def _():
        acc_ref[...] = jnp.zeros_like(acc_ref)

    acc_ref[...] += jnp.dot(x_ref[...], w_ref[...],
                            preferred_element_type=jnp.float32)

    @pl.when(k == pl.num_programs(2) - 1)
    def _():
        out = acc_ref[...] + b_ref[...].astype(jnp.float32)
        if activation is not None:
            out = activation(out)
        if r_ref is not None:
            out = out + r_ref[...].astype(jnp.float32)
        o_ref[...] = out.astype(o_ref.dtype)


def pallas_linear(x2d, w, b, *, residual=None, activation=None,
                  tm=256, tn=256, tk=512):
    """y = activation(x @ w + b) [+ residual]   with x:(M,K), w:(K,N), b:(N,)"""
    M, K = x2d.shape
    Kw, N = w.shape
    assert K == Kw

    tm = _pick_tile(M, tm, 8)
    tk = _pick_tile(K, tk, 128)
    tn = _pick_tile(N, tn, 128)
    grid = (M // tm, N // tn, K // tk)

    in_specs = [
        pl.BlockSpec((tm, tk), lambda i, j, k: (i, k)),
        pl.BlockSpec((tk, tn), lambda i, j, k: (k, j)),
        pl.BlockSpec((1, tn), lambda i, j, k: (0, j)),
    ]
    args = [x2d, w, b.reshape(1, N)]
    if residual is not None:
        in_specs.append(pl.BlockSpec((tm, tn), lambda i, j, k: (i, j)))
        args.append(residual)

    kernel = functools.partial(_linear_kernel,
                               has_residual=residual is not None,
                               activation=activation)
    return pl.pallas_call(
        kernel,
        out_shape=jax.ShapeDtypeStruct((M, N), x2d.dtype),
        grid=grid,
        in_specs=in_specs,
        out_specs=pl.BlockSpec((tm, tn), lambda i, j, k: (i, j)),
        scratch_shapes=[pltpu.VMEM((tm, tn), jnp.float32)],
        compiler_params=pltpu.CompilerParams(
            dimension_semantics=("parallel", "parallel", "arbitrary")),
    )(*args)


# -------------------------------- LayerNorm ---------------------------------
def _layernorm_kernel(x_ref, g_ref, b_ref, o_ref, *, eps):
    x = x_ref[...].astype(jnp.float32)
    mu = jnp.mean(x, axis=-1, keepdims=True)
    xc = x - mu
    var = jnp.mean(xc * xc, axis=-1, keepdims=True)
    inv = jax.lax.rsqrt(var + eps)
    o_ref[...] = (xc * inv * g_ref[...].astype(jnp.float32)
                  + b_ref[...].astype(jnp.float32)).astype(o_ref.dtype)


def pallas_layernorm(x2d, gamma, beta, *, eps=1e-5, tm=256):
    M, C = x2d.shape
    tm = _pick_tile(M, tm, 8)
    return pl.pallas_call(
        functools.partial(_layernorm_kernel, eps=eps),
        out_shape=jax.ShapeDtypeStruct((M, C), x2d.dtype),
        grid=(M // tm,),
        in_specs=[
            pl.BlockSpec((tm, C), lambda i: (i, 0)),
            pl.BlockSpec((1, C), lambda i: (0, 0)),
            pl.BlockSpec((1, C), lambda i: (0, 0)),
        ],
        out_specs=pl.BlockSpec((tm, C), lambda i: (i, 0)),
        compiler_params=pltpu.CompilerParams(
            dimension_semantics=("parallel",)),
    )(x2d, gamma.reshape(1, C), beta.reshape(1, C))


# --------------------------- causal attention --------------------------------
def _attn_kernel(qkv_ref, o_ref, *, n_head, scale):
    # qkv_ref block: (1, T, 3C) — slices q/k/v per head directly (no HBM split)
    _, T, C3 = qkv_ref.shape
    C = C3 // 3
    hd = C // n_head

    row = jax.lax.broadcasted_iota(jnp.int32, (T, T), 0)
    col = jax.lax.broadcasted_iota(jnp.int32, (T, T), 1)
    causal = row >= col

    outs = []
    for h in range(n_head):                      # static head loop
        lo = h * hd
        q = qkv_ref[0, :, lo:lo + hd].astype(jnp.float32) * scale
        k = qkv_ref[0, :, C + lo:C + lo + hd].astype(jnp.float32)
        v = qkv_ref[0, :, 2 * C + lo:2 * C + lo + hd].astype(jnp.float32)

        # q @ k^T via transposed contraction (no explicit transpose / XLU copy)
        s = jax.lax.dot_general(q, k, (((1,), (1,)), ((), ())),
                                preferred_element_type=jnp.float32)
        s = jnp.where(causal, s, -jnp.inf)
        m = jnp.max(s, axis=-1, keepdims=True)
        p = jnp.exp(s - m)
        denom = jnp.sum(p, axis=-1, keepdims=True)
        out = jnp.dot(p, v, preferred_element_type=jnp.float32)
        # apply 1/denom on the (T, hd) output, not the (T, T) score matrix
        out = out * pl.reciprocal(denom, approx=True)
        outs.append(out)

    # lane-dense single (T, C) store
    o_ref[0] = jnp.concatenate(outs, axis=-1).astype(o_ref.dtype)


def pallas_causal_attention(qkv, n_head, scale):
    B, T, C3 = qkv.shape
    C = C3 // 3
    kernel = functools.partial(_attn_kernel, n_head=n_head, scale=scale)
    return pl.pallas_call(
        kernel,
        out_shape=jax.ShapeDtypeStruct((B, T, C), qkv.dtype),
        grid=(B,),
        in_specs=[pl.BlockSpec((1, T, C3), lambda b: (b, 0, 0))],
        out_specs=pl.BlockSpec((1, T, C), lambda b: (b, 0, 0)),
        compiler_params=pltpu.CompilerParams(
            dimension_semantics=("parallel",)),
    )(qkv)


# ----------------------------- Block forward --------------------------------
def block_forward(x, params, n_head):
    B, T, C = x.shape
    assert C % n_head == 0
    head_dim = C // n_head
    scale = head_dim ** (-0.5)
    x2d = x.reshape(B * T, C)

    # --- attention branch: x = x + c_proj(attn(c_attn(ln_1(x)))) ---
    h1 = pallas_layernorm(x2d, params["ln1_g"], params["ln1_b"])
    qkv = pallas_linear(h1, params["w_attn"], params["b_attn"])
    y = pallas_causal_attention(qkv.reshape(B, T, 3 * C), n_head, scale)
    x2d = pallas_linear(y.reshape(B * T, C),
                        params["w_attn_proj"], params["b_attn_proj"],
                        residual=x2d)

    # --- MLP branch: x = x + c_proj(gelu(c_fc(ln_2(x)))) ---
    h2 = pallas_layernorm(x2d, params["ln2_g"], params["ln2_b"])
    hmid = pallas_linear(h2, params["w_fc"], params["b_fc"],
                         activation=lambda z: jax.nn.gelu(z, approximate=True))
    x2d = pallas_linear(hmid, params["w_mlp_proj"], params["b_mlp_proj"],
                        residual=x2d)
    return x2d.reshape(B, T, C)


# ---------------------------- pure-JAX reference -----------------------------
def reference(x, params, n_head):
    B, T, C = x.shape
    hd = C // n_head

    def ln(z, g, b):
        mu = z.mean(-1, keepdims=True)
        var = ((z - mu) ** 2).mean(-1, keepdims=True)
        return (z - mu) / jnp.sqrt(var + 1e-5) * g + b

    # attention
    h = ln(x, params["ln1_g"], params["ln1_b"])
    qkv = h @ params["w_attn"] + params["b_attn"]
    q, k, v = jnp.split(qkv, 3, axis=-1)
    q = q.reshape(B, T, n_head, hd).transpose(0, 2, 1, 3)
    k = k.reshape(B, T, n_head, hd).transpose(0, 2, 1, 3)
    v = v.reshape(B, T, n_head, hd).transpose(0, 2, 1, 3)
    s = jnp.einsum("bhqd,bhkd->bhqk", q, k) * (hd ** -0.5)
    mask = jnp.tril(jnp.ones((T, T), dtype=bool))
    s = jnp.where(mask[None, None], s, -jnp.inf)
    p = jax.nn.softmax(s, axis=-1)
    y = jnp.einsum("bhqk,bhkd->bhqd", p, v)
    y = y.transpose(0, 2, 1, 3).reshape(B, T, C)
    x = x + (y @ params["w_attn_proj"] + params["b_attn_proj"])

    # MLP
    h2 = ln(x, params["ln2_g"], params["ln2_b"])
    hmid = jax.nn.gelu(h2 @ params["w_fc"] + params["b_fc"], approximate=True)
    x = x + (hmid @ params["w_mlp_proj"] + params["b_mlp_proj"])
    return x


if __name__ == "__main__":
    # Small config consistent with the module: n_embd=32, n_head=4, T<=block_size.
    B, T, C, n_head = 2, 8, 32, 4

    key = jax.random.PRNGKey(0)
    ks = jax.random.split(key, 12)

    x = jax.random.normal(ks[0], (B, T, C), dtype=jnp.float32)
    params = {
        "ln1_g": 1.0 + 0.1 * jax.random.normal(ks[1], (C,), jnp.float32),
        "ln1_b": 0.05 * jax.random.normal(ks[2], (C,), jnp.float32),
        # linear weights stored as (in_features, out_features)
        "w_attn": 0.02 * jax.random.normal(ks[3], (C, 3 * C), jnp.float32),
        "b_attn": 0.01 * jax.random.normal(ks[4], (3 * C,), jnp.float32),
        "w_attn_proj": 0.02 * jax.random.normal(ks[5], (C, C), jnp.float32),
        "b_attn_proj": 0.01 * jax.random.normal(ks[6], (C,), jnp.float32),
        "ln2_g": 1.0 + 0.1 * jax.random.normal(ks[7], (C,), jnp.float32),
        "ln2_b": 0.05 * jax.random.normal(ks[8], (C,), jnp.float32),
        "w_fc": 0.02 * jax.random.normal(ks[9], (C, 4 * C), jnp.float32),
        "b_fc": 0.01 * jax.random.normal(ks[10], (4 * C,), jnp.float32),
        "w_mlp_proj": 0.02 * jax.random.normal(ks[11], (4 * C, C), jnp.float32),
        "b_mlp_proj": jnp.zeros((C,), jnp.float32),
    }

    fwd = jax.jit(block_forward, static_argnums=2)
    y = jax.block_until_ready(fwd(x, params, n_head))

    y_ref = reference(x, params, n_head)
    assert y.shape == (B, T, C)
    max_err = float(jnp.max(jnp.abs(y - y_ref)))
    # tolerance loosened slightly for pl.reciprocal(approx=True) in the softmax
    assert jnp.allclose(y, y_ref, atol=2e-3, rtol=2e-3), max_err

    print("KERNEL_OK")
</pallas_src>

<mosaic_0001>
module attributes {stable_mosaic.version = 11 : i64} {
  func.func @_linear_kernel(%arg0: i32, %arg1: i32, %arg2: i32, %arg3: memref<16x32xf32, #tpu.memory_space<vmem>>, %arg4: memref<32x96xf32, #tpu.memory_space<vmem>>, %arg5: memref<1x96xf32, #tpu.memory_space<vmem>>, %arg6: memref<16x96xf32, #tpu.memory_space<vmem>>, %arg7: memref<16x96xf32, #tpu.memory_space<vmem>>) attributes {dimension_semantics = [#tpu.dimension_semantics<parallel>, #tpu.dimension_semantics<parallel>, #tpu.dimension_semantics<arbitrary>], iteration_bounds = array<i64: 1, 1, 1>, scalar_prefetch = 0 : i64, scratch_operands = 1 : i64, tpu.core_type = #tpu.core_type<tc>, window_params = [{transform_indices = @transform_0, window_bounds = array<i64: 16, 32>}, {transform_indices = @transform_1, window_bounds = array<i64: 32, 96>}, {transform_indices = @transform_2, window_bounds = array<i64: 1, 96>}, {transform_indices = @transform_3, window_bounds = array<i64: 16, 96>}]} {
    %c0_i32 = arith.constant 0 : i32
    %0 = arith.cmpi eq, %arg2, %c0_i32 : i32
    %1 = arith.extui %0 : i1 to i32
    %c0_i32_0 = arith.constant 0 : i32
    %2 = arith.cmpi ne, %1, %c0_i32_0 : i32
    scf.if %2 {
      %cst_10 = arith.constant 0.000000e+00 : f32
      %12 = vector.broadcast %cst_10 : f32 to vector<16x96xf32>
      %c0_11 = arith.constant 0 : index
      %c0_12 = arith.constant 0 : index
      %13 = vector.load %arg7[%c0_11, %c0_12] : memref<16x96xf32, #tpu.memory_space<vmem>>, vector<16x96xf32>
      tpu.vector_store %arg7[%c0_11, %c0_12], %12 {strides = array<i32>} : memref<16x96xf32, #tpu.memory_space<vmem>>, vector<16x96xf32>,
    } else {
    }
    %c0 = arith.constant 0 : index
    %c0_1 = arith.constant 0 : index
    %3 = vector.load %arg7[%c0, %c0_1] : memref<16x96xf32, #tpu.memory_space<vmem>>, vector<16x96xf32>
    %c0_2 = arith.constant 0 : index
    %c0_3 = arith.constant 0 : index
    %4 = vector.load %arg3[%c0_2, %c0_3] : memref<16x32xf32, #tpu.memory_space<vmem>>, vector<16x32xf32>
    %c0_4 = arith.constant 0 : index
    %c0_5 = arith.constant 0 : index
    %5 = vector.load %arg4[%c0_4, %c0_5] : memref<32x96xf32, #tpu.memory_space<vmem>>, vector<32x96xf32>
    %cst = arith.constant dense<0.000000e+00> : vector<16x96xf32>
    %6 = tpu.matmul %4, %5, %cst {dimension_numbers = #tpu.dot_dimension_numbers<[1], [0], [0], [1], [0, 0, 1, 1], [], []>} : vector<16x32xf32>, vector<32x96xf32>, vector<16x96xf32> -> vector<16x96xf32>
    %7 = arith.addf %3, %6 : vector<16x96xf32>
    %c0_6 = arith.constant 0 : index
    %c0_7 = arith.constant 0 : index
    %8 = vector.load %arg7[%c0_6, %c0_7] : memref<16x96xf32, #tpu.memory_space<vmem>>, vector<16x96xf32>
    tpu.vector_store %arg7[%c0_6, %c0_7], %7 {strides = array<i32>} : memref<16x96xf32, #tpu.memory_space<vmem>>, vector<16x96xf32>,
    %c0_i32_8 = arith.constant 0 : i32
    %9 = arith.cmpi eq, %arg2, %c0_i32_8 : i32
    %10 = arith.extui %9 : i1 to i32
    %c0_i32_9 = arith.constant 0 : i32
    %11 = arith.cmpi ne, %10, %c0_i32_9 : i32
    scf.if %11 {
      %c0_10 = arith.constant 0 : index
      %c0_11 = arith.constant 0 : index
      %12 = vector.load %arg7[%c0_10, %c0_11] : memref<16x96xf32, #tpu.memory_space<vmem>>, vector<16x96xf32>
      %c0_12 = arith.constant 0 : index
      %c0_13 = arith.constant 0 : index
      %13 = vector.load %arg5[%c0_12, %c0_13] : memref<1x96xf32, #tpu.memory_space<vmem>>, vector<1x96xf32>
      %14 = vector.broadcast %13 : vector<1x96xf32> to vector<16x96xf32>
      %15 = arith.addf %12, %14 : vector<16x96xf32>
      %c0_14 = arith.constant 0 : index
      %c0_15 = arith.constant 0 : index
      %16 = vector.load %arg6[%c0_14, %c0_15] : memref<16x96xf32, #tpu.memory_space<vmem>>, vector<16x96xf32>
      tpu.vector_store %arg6[%c0_14, %c0_15], %15 {strides = array<i32>} : memref<16x96xf32, #tpu.memory_space<vmem>>, vector<16x96xf32>,
    } else {
    }
    return
  }
  func.func @transform_0(%arg0: i32, %arg1: i32, %arg2: i32) -> (i32, i32) {
    %c0_i32 = arith.constant 0 : i32
    return %arg0, %arg2 : i32, i32
  }
  func.func @transform_1(%arg0: i32, %arg1: i32, %arg2: i32) -> (i32, i32) {
    %c0_i32 = arith.constant 0 : i32
    return %arg2, %arg1 : i32, i32
  }
  func.func @transform_2(%arg0: i32, %arg1: i32, %arg2: i32) -> (i32, i32) {
    %c0_i32 = arith.constant 0 : i32
    %c0_i32_0 = arith.constant 0 : i32
    return %c0_i32, %arg1 : i32, i32
  }
  func.func @transform_3(%arg0: i32, %arg1: i32, %arg2: i32) -> (i32, i32) {
    %c0_i32 = arith.constant 0 : i32
    return %arg0, %arg1 : i32, i32
  }
}

module attributes {stable_mosaic.version = 11 : i64} {
  func.func @_attn_kernel(%arg0: i32, %arg1: memref<1x8x96xf32, #tpu.memory_space<vmem>>, %arg2: memref<1x8x32xf32, #tpu.memory_space<vmem>>) attributes {dimension_semantics = [#tpu.dimension_semantics<parallel>], iteration_bounds = array<i64: 2>, scalar_prefetch = 0 : i64, scratch_operands = 0 : i64, tpu.core_type = #tpu.core_type<tc>, window_params = [{transform_indices = @transform_0, window_bounds = array<i64: 1, 8, 96>}, {transform_indices = @transform_1, window_bounds = array<i64: 1, 8, 32>}]} {
    %0 = tpu.iota {dimensions = array<i32: 0>} : vector<8x8xi32>
    %1 = tpu.iota {dimensions = array<i32: 1>} : vector<8x8xi32>
    %2 = arith.cmpi sge, %0, %1 : vector<8x8xi32>
    %c0 = arith.constant 0 : index
    %c0_0 = arith.constant 0 : index
    %c0_1 = arith.constant 0 : index
    %3 = vector.load %arg1[%c0, %c0_0, %c0_1] : memref<1x8x96xf32, #tpu.memory_space<vmem>>, vector<1x8x8xf32>
    %4 = vector.shape_cast %3 : vector<1x8x8xf32> to vector<8x8xf32>
    %cst = arith.constant 0.353553385 : f32
    %5 = vector.broadcast %cst : f32 to vector<8x8xf32>
    %6 = arith.mulf %4, %5 : vector<8x8xf32>
    %c0_2 = arith.constant 0 : index
    %c0_3 = arith.constant 0 : index
    %c32 = arith.constant 32 : index
    %7 = vector.load %arg1[%c0_2, %c0_3, %c32] : memref<1x8x96xf32, #tpu.memory_space<vmem>>, vector<1x8x8xf32>
    %8 = vector.shape_cast %7 : vector<1x8x8xf32> to vector<8x8xf32>
    %c0_4 = arith.constant 0 : index
    %c0_5 = arith.constant 0 : index
    %c64 = arith.constant 64 : index
    %9 = vector.load %arg1[%c0_4, %c0_5, %c64] : memref<1x8x96xf32, #tpu.memory_space<vmem>>, vector<1x8x8xf32>
    %10 = vector.shape_cast %9 : vector<1x8x8xf32> to vector<8x8xf32>
    %cst_6 = arith.constant dense<0.000000e+00> : vector<8x8xf32>
    %11 = tpu.matmul %6, %8, %cst_6 {dimension_numbers = #tpu.dot_dimension_numbers<[1], [1], [0], [0], [0, 0, 1, 0], [], []>} : vector<8x8xf32>, vector<8x8xf32>, vector<8x8xf32> -> vector<8x8xf32>
    %cst_7 = arith.constant 0xFF800000 : f32
    %12 = vector.broadcast %cst_7 : f32 to vector<8x8xf32>
    %13 = arith.select %2, %11, %12 : vector<8x8xi1>, vector<8x8xf32>
    %cst_8 = arith.constant dense<0xFF800000> : vector<8xf32>
    %14 = vector.multi_reduction <maximumf>, %13, %cst_8 [1] : vector<8x8xf32> to vector<8xf32>
    %15 = vector.shape_cast %14 : vector<8xf32> to vector<8x1xf32>
    %16 = vector.broadcast %15 : vector<8x1xf32> to vector<8x8xf32>
    %17 = arith.subf %13, %16 : vector<8x8xf32>
    %18 = math.exp %17 : vector<8x8xf32>
    %cst_9 = arith.constant dense<0.000000e+00> : vector<8xf32>
    %19 = vector.multi_reduction <add>, %18, %cst_9 [1] : vector<8x8xf32> to vector<8xf32>
    %20 = vector.shape_cast %19 : vector<8xf32> to vector<8x1xf32>
    %cst_10 = arith.constant dense<0.000000e+00> : vector<8x8xf32>
    %21 = tpu.matmul %18, %10, %cst_10 {dimension_numbers = #tpu.dot_dimension_numbers<[1], [0], [0], [1], [0, 0, 1, 1], [], []>} : vector<8x8xf32>, vector<8x8xf32>, vector<8x8xf32> -> vector<8x8xf32>
    %22 = tpu.reciprocal %20 {approx = true} : vector<8x1xf32> -> vector<8x1xf32>
    %23 = vector.broadcast %22 : vector<8x1xf32> to vector<8x8xf32>
    %24 = arith.mulf %21, %23 : vector<8x8xf32>
    %c0_11 = arith.constant 0 : index
    %c0_12 = arith.constant 0 : index
    %c8 = arith.constant 8 : index
    %25 = vector.load %arg1[%c0_11, %c0_12, %c8] : memref<1x8x96xf32, #tpu.memory_space<vmem>>, vector<1x8x8xf32>
    %26 = vector.shape_cast %25 : vector<1x8x8xf32> to vector<8x8xf32>
    %cst_13 = arith.constant 0.353553385 : f32
    %27 = vector.broadcast %cst_13 : f32 to vector<8x8xf32>
    %28 = arith.mulf %26, %27 : vector<8x8xf32>
    %c0_14 = arith.constant 0 : index
    %c0_15 = arith.constant 0 : index
    %c40 = arith.constant 40 : index
    %29 = vector.load %arg1[%c0_14, %c0_15, %c40] : memref<1x8x96xf32, #tpu.memory_space<vmem>>, vector<1x8x8xf32>
    %30 = vector.shape_cast %29 : vector<1x8x8xf32> to vector<8x8xf32>
    %c0_16 = arith.constant 0 : index
    %c0_17 = arith.constant 0 : index
    %c72 = arith.constant 72 : index
    %31 = vector.load %arg1[%c0_16, %c0_17, %c72] : memref<1x8x96xf32, #tpu.memory_space<vmem>>, vector<1x8x8xf32>
    %32 = vector.shape_cast %31 : vector<1x8x8xf32> to vector<8x8xf32>
    %cst_18 = arith.constant dense<0.000000e+00> : vector<8x8xf32>
    %33 = tpu.matmul %28, %30, %cst_18 {dimension_numbers = #tpu.dot_dimension_numbers<[1], [1], [0], [0], [0, 0, 1, 0], [], []>} : vector<8x8xf32>, vector<8x8xf32>, vector<8x8xf32> -> vector<8x8xf32>
    %cst_19 = arith.constant 0xFF800000 : f32
    %34 = vector.broadcast %cst_19 : f32 to vector<8x8xf32>
    %35 = arith.select %2, %33, %34 : vector<8x8xi1>, vector<8x8xf32>
    %cst_20 = arith.constant dense<0xFF800000> : vector<8xf32>
    %36 = vector.multi_reduction <maximumf>, %35, %cst_20 [1] : vector<8x8xf32> to vector<8xf32>
    %37 = vector.shape_cast %36 : vector<8xf32> to vector<8x1xf32>
    %38 = vector.broadcast %37 : vector<8x1xf32> to vector<8x8xf32>
    %39 = arith.subf %35, %38 : vector<8x8xf32>
    %40 = math.exp %39 : vector<8x8xf32>
    %cst_21 = arith.constant dense<0.000000e+00> : vector<8xf32>
    %41 = vector.multi_reduction <add>, %40, %cst_21 [1] : vector<8x8xf32> to vector<8xf32>
    %42 = vector.shape_cast %41 : vector<8xf32> to vector<8x1xf32>
    %cst_22 = arith.constant dense<0.000000e+00> : vector<8x8xf32>
    %43 = tpu.matmul %40, %32, %cst_22 {dimension_numbers = #tpu.dot_dimension_numbers<[1], [0], [0], [1], [0, 0, 1, 1], [], []>} : vector<8x8xf32>, vector<8x8xf32>, vector<8x8xf32> -> vector<8x8xf32>
    %44 = tpu.reciprocal %42 {approx = true} : vector<8x1xf32> -> vector<8x1xf32>
    %45 = vector.broadcast %44 : vector<8x1xf32> to vector<8x8xf32>
    %46 = arith.mulf %43, %45 : vector<8x8xf32>
    %c0_23 = arith.constant 0 : index
    %c0_24 = arith.constant 0 : index
    %c16 = arith.constant 16 : index
    %47 = vector.load %arg1[%c0_23, %c0_24, %c16] : memref<1x8x96xf32, #tpu.memory_space<vmem>>, vector<1x8x8xf32>
    %48 = vector.shape_cast %47 : vector<1x8x8xf32> to vector<8x8xf32>
    %cst_25 = arith.constant 0.353553385 : f32
    %49 = vector.broadcast %cst_25 : f32 to vector<8x8xf32>
    %50 = arith.mulf %48, %49 : vector<8x8xf32>
    %c0_26 = arith.constant 0 : index
    %c0_27 = arith.constant 0 : index
    %c48 = arith.constant 48 : index
    %51 = vector.load %arg1[%c0_26, %c0_27, %c48] : memref<1x8x96xf32, #tpu.memory_space<vmem>>, vector<1x8x8xf32>
    %52 = vector.shape_cast %51 : vector<1x8x8xf32> to vector<8x8xf32>
    %c0_28 = arith.constant 0 : index
    %c0_29 = arith.constant 0 : index
    %c80 = arith.constant 80 : index
    %53 = vector.load %arg1[%c0_28, %c0_29, %c80] : memref<1x8x96xf32, #tpu.memory_space<vmem>>, vector<1x8x8xf32>
    %54 = vector.shape_cast %53 : vector<1x8x8xf32> to vector<8x8xf32>
    %cst_30 = arith.constant dense<0.000000e+00> : vector<8x8xf32>
    %55 = tpu.matmul %50, %52, %cst_30 {dimension_numbers = #tpu.dot_dimension_numbers<[1], [1], [0], [0], [0, 0, 1, 0], [], []>} : vector<8x8xf32>, vector<8x8xf32>, vector<8x8xf32> -> vector<8x8xf32>
    %cst_31 = arith.constant 0xFF800000 : f32
    %56 = vector.broadcast %cst_31 : f32 to vector<8x8xf32>
    %57 = arith.select %2, %55, %56 : vector<8x8xi1>, vector<8x8xf32>
    %cst_32 = arith.constant dense<0xFF800000> : vector<8xf32>
    %58 = vector.multi_reduction <maximumf>, %57, %cst_32 [1] : vector<8x8xf32> to vector<8xf32>
    %59 = vector.shape_cast %58 : vector<8xf32> to vector<8x1xf32>
    %60 = vector.broadcast %59 : vector<8x1xf32> to vector<8x8xf32>
    %61 = arith.subf %57, %60 : vector<8x8xf32>
    %62 = math.exp %61 : vector<8x8xf32>
    %cst_33 = arith.constant dense<0.000000e+00> : vector<8xf32>
    %63 = vector.multi_reduction <add>, %62, %cst_33 [1] : vector<8x8xf32> to vector<8xf32>
    %64 = vector.shape_cast %63 : vector<8xf32> to vector<8x1xf32>
    %cst_34 = arith.constant dense<0.000000e+00> : vector<8x8xf32>
    %65 = tpu.matmul %62, %54, %cst_34 {dimension_numbers = #tpu.dot_dimension_numbers<[1], [0], [0], [1], [0, 0, 1, 1], [], []>} : vector<8x8xf32>, vector<8x8xf32>, vector<8x8xf32> -> vector<8x8xf32>
    %66 = tpu.reciprocal %64 {approx = true} : vector<8x1xf32> -> vector<8x1xf32>
    %67 = vector.broadcast %66 : vector<8x1xf32> to vector<8x8xf32>
    %68 = arith.mulf %65, %67 : vector<8x8xf32>
    %c0_35 = arith.constant 0 : index
    %c0_36 = arith.constant 0 : index
    %c24 = arith.constant 24 : index
    %69 = vector.load %arg1[%c0_35, %c0_36, %c24] : memref<1x8x96xf32, #tpu.memory_space<vmem>>, vector<1x8x8xf32>
    %70 = vector.shape_cast %69 : vector<1x8x8xf32> to vector<8x8xf32>
    %cst_37 = arith.constant 0.353553385 : f32
    %71 = vector.broadcast %cst_37 : f32 to vector<8x8xf32>
    %72 = arith.mulf %70, %71 : vector<8x8xf32>
    %c0_38 = arith.constant 0 : index
    %c0_39 = arith.constant 0 : index
    %c56 = arith.constant 56 : index
    %73 = vector.load %arg1[%c0_38, %c0_39, %c56] : memref<1x8x96xf32, #tpu.memory_space<vmem>>, vector<1x8x8xf32>
    %74 = vector.shape_cast %73 : vector<1x8x8xf32> to vector<8x8xf32>
    %c0_40 = arith.constant 0 : index
    %c0_41 = arith.constant 0 : index
    %c88 = arith.constant 88 : index
    %75 = vector.load %arg1[%c0_40, %c0_41, %c88] : memref<1x8x96xf32, #tpu.memory_space<vmem>>, vector<1x8x8xf32>
    %76 = vector.shape_cast %75 : vector<1x8x8xf32> to vector<8x8xf32>
    %cst_42 = arith.constant dense<0.000000e+00> : vector<8x8xf32>
    %77 = tpu.matmul %72, %74, %cst_42 {dimension_numbers = #tpu.dot_dimension_numbers<[1], [1], [0], [0], [0, 0, 1, 0], [], []>} : vector<8x8xf32>, vector<8x8xf32>, vector<8x8xf32> -> vector<8x8xf32>
    %cst_43 = arith.constant 0xFF800000 : f32
    %78 = vector.broadcast %cst_43 : f32 to vector<8x8xf32>
    %79 = arith.select %2, %77, %78 : vector<8x8xi1>, vector<8x8xf32>
    %cst_44 = arith.constant dense<0xFF800000> : vector<8xf32>
    %80 = vector.multi_reduction <maximumf>, %79, %cst_44 [1] : vector<8x8xf32> to vector<8xf32>
    %81 = vector.shape_cast %80 : vector<8xf32> to vector<8x1xf32>
    %82 = vector.broadcast %81 : vector<8x1xf32> to vector<8x8xf32>
    %83 = arith.subf %79, %82 : vector<8x8xf32>
    %84 = math.exp %83 : vector<8x8xf32>
    %cst_45 = arith.constant dense<0.000000e+00> : vector<8xf32>
    %85 = vector.multi_reduction <add>, %84, %cst_45 [1] : vector<8x8xf32> to vector<8xf32>
    %86 = vector.shape_cast %85 : vector<8xf32> to vector<8x1xf32>
    %cst_46 = arith.constant dense<0.000000e+00> : vector<8x8xf32>
    %87 = tpu.matmul %84, %76, %cst_46 {dimension_numbers = #tpu.dot_dimension_numbers<[1], [0], [0], [1], [0, 0, 1, 1], [], []>} : vector<8x8xf32>, vector<8x8xf32>, vector<8x8xf32> -> vector<8x8xf32>
    %88 = tpu.reciprocal %86 {approx = true} : vector<8x1xf32> -> vector<8x1xf32>
    %89 = vector.broadcast %88 : vector<8x1xf32> to vector<8x8xf32>
    %90 = arith.mulf %87, %89 : vector<8x8xf32>
    %91 = tpu.concatenate %24, %46, %68, %90 in 1 : vector<8x8xf32>, vector<8x8xf32>, vector<8x8xf32>, vector<8x8xf32> -> vector<8x32xf32>
    %c0_47 = arith.constant 0 : index
    %c0_48 = arith.constant 0 : index
    %c0_49 = arith.constant 0 : index
    %92 = vector.load %arg2[%c0_47, %c0_48, %c0_49] : memref<1x8x32xf32, #tpu.memory_space<vmem>>, vector<1x8x32xf32>
    %93 = vector.shape_cast %92 : vector<1x8x32xf32> to vector<8x32xf32>
    %94 = vector.shape_cast %91 : vector<8x32xf32> to vector<1x8x32xf32>
    tpu.vector_store %arg2[%c0_47, %c0_48, %c0_49], %94 {strides = array<i32>} : memref<1x8x32xf32, #tpu.memory_space<vmem>>, vector<1x8x32xf32>,
    return
  }
  func.func @transform_0(%arg0: i32) -> (i32, i32, i32) {
    %c0_i32 = arith.constant 0 : i32
    %c0_i32_0 = arith.constant 0 : i32
    %c0_i32_1 = arith.constant 0 : i32
    return %arg0, %c0_i32, %c0_i32_0 : i32, i32, i32
  }
  func.func @transform_1(%arg0: i32) -> (i32, i32, i32) {
    %c0_i32 = arith.constant 0 : i32
    %c0_i32_0 = arith.constant 0 : i32
    %c0_i32_1 = arith.constant 0 : i32
    return %arg0, %c0_i32, %c0_i32_0 : i32, i32, i32
  }
}

module attributes {stable_mosaic.version = 11 : i64} {
  func.func @_layernorm_kernel(%arg0: i32, %arg1: memref<16x32xf32, #tpu.memory_space<vmem>>, %arg2: memref<1x32xf32, #tpu.memory_space<vmem>>, %arg3: memref<1x32xf32, #tpu.memory_space<vmem>>, %arg4: memref<16x32xf32, #tpu.memory_space<vmem>>) attributes {dimension_semantics = [#tpu.dimension_semantics<parallel>], iteration_bounds = array<i64: 1>, scalar_prefetch = 0 : i64, scratch_operands = 0 : i64, tpu.core_type = #tpu.core_type<tc>, window_params = [{transform_indices = @transform_0, window_bounds = array<i64: 16, 32>}, {pipeline_mode = #tpu.pipeline_mode<synchronous>, transform_indices = @transform_1, window_bounds = array<i64: 1, 32>}, {pipeline_mode = #tpu.pipeline_mode<synchronous>, transform_indices = @transform_2, window_bounds = array<i64: 1, 32>}, {transform_indices = @transform_3, window_bounds = array<i64: 16, 32>}]} {
    %c0 = arith.constant 0 : index
    %c0_0 = arith.constant 0 : index
    %0 = vector.load %arg1[%c0, %c0_0] : memref<16x32xf32, #tpu.memory_space<vmem>>, vector<16x32xf32>
    %cst = arith.constant dense<0.000000e+00> : vector<16xf32>
    %1 = vector.multi_reduction <add>, %0, %cst [1] : vector<16x32xf32> to vector<16xf32>
    %2 = vector.shape_cast %1 : vector<16xf32> to vector<16x1xf32>
    %cst_1 = arith.constant 3.200000e+01 : f32
    %3 = vector.broadcast %cst_1 : f32 to vector<16x1xf32>
    %4 = arith.divf %2, %3 : vector<16x1xf32>
    %5 = vector.broadcast %4 : vector<16x1xf32> to vector<16x32xf32>
    %6 = arith.subf %0, %5 : vector<16x32xf32>
    %7 = arith.mulf %6, %6 : vector<16x32xf32>
    %cst_2 = arith.constant dense<0.000000e+00> : vector<16xf32>
    %8 = vector.multi_reduction <add>, %7, %cst_2 [1] : vector<16x32xf32> to vector<16xf32>
    %9 = vector.shape_cast %8 : vector<16xf32> to vector<16x1xf32>
    %cst_3 = arith.constant 3.200000e+01 : f32
    %10 = vector.broadcast %cst_3 : f32 to vector<16x1xf32>
    %11 = arith.divf %9, %10 : vector<16x1xf32>
    %cst_4 = arith.constant 9.99999974E-6 : f32
    %12 = vector.broadcast %cst_4 : f32 to vector<16x1xf32>
    %13 = arith.addf %11, %12 : vector<16x1xf32>
    %14 = math.rsqrt %13 : vector<16x1xf32>
    %15 = vector.broadcast %14 : vector<16x1xf32> to vector<16x32xf32>
    %16 = arith.mulf %6, %15 : vector<16x32xf32>
    %c0_5 = arith.constant 0 : index
    %c0_6 = arith.constant 0 : index
    %17 = vector.load %arg2[%c0_5, %c0_6] : memref<1x32xf32, #tpu.memory_space<vmem>>, vector<1x32xf32>
    %18 = vector.broadcast %17 : vector<1x32xf32> to vector<16x32xf32>
    %19 = arith.mulf %16, %18 : vector<16x32xf32>
    %c0_7 = arith.constant 0 : index
    %c0_8 = arith.constant 0 : index
    %20 = vector.load %arg3[%c0_7, %c0_8] : memref<1x32xf32, #tpu.memory_space<vmem>>, vector<1x32xf32>
    %21 = vector.broadcast %20 : vector<1x32xf32> to vector<16x32xf32>
    %22 = arith.addf %19, %21 : vector<16x32xf32>
    %c0_9 = arith.constant 0 : index
    %c0_10 = arith.constant 0 : index
    %23 = vector.load %arg4[%c0_9, %c0_10] : memref<16x32xf32, #tpu.memory_space<vmem>>, vector<16x32xf32>
    tpu.vector_store %arg4[%c0_9, %c0_10], %22 {strides = array<i32>} : memref<16x32xf32, #tpu.memory_space<vmem>>, vector<16x32xf32>,
    return
  }
  func.func @transform_0(%arg0: i32) -> (i32, i32) {
    %c0_i32 = arith.constant 0 : i32
    %c0_i32_0 = arith.constant 0 : i32
    return %arg0, %c0_i32 : i32, i32
  }
  func.func @transform_1(%arg0: i32) -> (i32, i32) {
    %c0_i32 = arith.constant 0 : i32
    %c0_i32_0 = arith.constant 0 : i32
    %c0_i32_1 = arith.constant 0 : i32
    return %c0_i32, %c0_i32_0 : i32, i32
  }
  func.func @transform_2(%arg0: i32) -> (i32, i32) {
    %c0_i32 = arith.constant 0 : i32
    %c0_i32_0 = arith.constant 0 : i32
    %c0_i32_1 = arith.constant 0 : i32
    return %c0_i32, %c0_i32_0 : i32, i32
  }
  func.func @transform_3(%arg0: i32) -> (i32, i32) {
    %c0_i32 = arith.constant 0 : i32
    %c0_i32_0 = arith.constant 0 : i32
    return %arg0, %c0_i32 : i32, i32
  }
}

module attributes {stable_mosaic.version = 11 : i64} {
  func.func @_linear_kernel(%arg0: i32, %arg1: i32, %arg2: i32, %arg3: memref<16x32xf32, #tpu.memory_space<vmem>>, %arg4: memref<32x32xf32, #tpu.memory_space<vmem>>, %arg5: memref<1x32xf32, #tpu.memory_space<vmem>>, %arg6: memref<16x32xf32, #tpu.memory_space<vmem>>, %arg7: memref<16x32xf32, #tpu.memory_space<vmem>>, %arg8: memref<16x32xf32, #tpu.memory_space<vmem>>) attributes {dimension_semantics = [#tpu.dimension_semantics<parallel>, #tpu.dimension_semantics<parallel>, #tpu.dimension_semantics<arbitrary>], iteration_bounds = array<i64: 1, 1, 1>, scalar_prefetch = 0 : i64, scratch_operands = 1 : i64, tpu.core_type = #tpu.core_type<tc>, window_params = [{transform_indices = @transform_0, window_bounds = array<i64: 16, 32>}, {transform_indices = @transform_1, window_bounds = array<i64: 32, 32>}, {transform_indices = @transform_2, window_bounds = array<i64: 1, 32>}, {transform_indices = @transform_3, window_bounds = array<i64: 16, 32>}, {transform_indices = @transform_4, window_bounds = array<i64: 16, 32>}]} {
    %c0_i32 = arith.constant 0 : i32
    %0 = arith.cmpi eq, %arg2, %c0_i32 : i32
    %1 = arith.extui %0 : i1 to i32
    %c0_i32_0 = arith.constant 0 : i32
    %2 = arith.cmpi ne, %1, %c0_i32_0 : i32
    scf.if %2 {
      %cst_10 = arith.constant 0.000000e+00 : f32
      %12 = vector.broadcast %cst_10 : f32 to vector<16x32xf32>
      %c0_11 = arith.constant 0 : index
      %c0_12 = arith.constant 0 : index
      %13 = vector.load %arg8[%c0_11, %c0_12] : memref<16x32xf32, #tpu.memory_space<vmem>>, vector<16x32xf32>
      tpu.vector_store %arg8[%c0_11, %c0_12], %12 {strides = array<i32>} : memref<16x32xf32, #tpu.memory_space<vmem>>, vector<16x32xf32>,
    } else {
    }
    %c0 = arith.constant 0 : index
    %c0_1 = arith.constant 0 : index
    %3 = vector.load %arg8[%c0, %c0_1] : memref<16x32xf32, #tpu.memory_space<vmem>>, vector<16x32xf32>
    %c0_2 = arith.constant 0 : index
    %c0_3 = arith.constant 0 : index
    %4 = vector.load %arg3[%c0_2, %c0_3] : memref<16x32xf32, #tpu.memory_space<vmem>>, vector<16x32xf32>
    %c0_4 = arith.constant 0 : index
    %c0_5 = arith.constant 0 : index
    %5 = vector.load %arg4[%c0_4, %c0_5] : memref<32x32xf32, #tpu.memory_space<vmem>>, vector<32x32xf32>
    %cst = arith.constant dense<0.000000e+00> : vector<16x32xf32>
    %6 = tpu.matmul %4, %5, %cst {dimension_numbers = #tpu.dot_dimension_numbers<[1], [0], [0], [1], [0, 0, 1, 1], [], []>} : vector<16x32xf32>, vector<32x32xf32>, vector<16x32xf32> -> vector<16x32xf32>
    %7 = arith.addf %3, %6 : vector<16x32xf32>
    %c0_6 = arith.constant 0 : index
    %c0_7 = arith.constant 0 : index
    %8 = vector.load %arg8[%c0_6, %c0_7] : memref<16x32xf32, #tpu.memory_space<vmem>>, vector<16x32xf32>
    tpu.vector_store %arg8[%c0_6, %c0_7], %7 {strides = array<i32>} : memref<16x32xf32, #tpu.memory_space<vmem>>, vector<16x32xf32>,
    %c0_i32_8 = arith.constant 0 : i32
    %9 = arith.cmpi eq, %arg2, %c0_i32_8 : i32
    %10 = arith.extui %9 : i1 to i32
    %c0_i32_9 = arith.constant 0 : i32
    %11 = arith.cmpi ne, %10, %c0_i32_9 : i32
    scf.if %11 {
      %c0_10 = arith.constant 0 : index
      %c0_11 = arith.constant 0 : index
      %12 = vector.load %arg8[%c0_10, %c0_11] : memref<16x32xf32, #tpu.memory_space<vmem>>, vector<16x32xf32>
      %c0_12 = arith.constant 0 : index
      %c0_13 = arith.constant 0 : index
      %13 = vector.load %arg5[%c0_12, %c0_13] : memref<1x32xf32, #tpu.memory_space<vmem>>, vector<1x32xf32>
      %14 = vector.broadcast %13 : vector<1x32xf32> to vector<16x32xf32>
      %15 = arith.addf %12, %14 : vector<16x32xf32>
      %c0_14 = arith.constant 0 : index
      %c0_15 = arith.constant 0 : index
      %16 = vector.load %arg6[%c0_14, %c0_15] : memref<16x32xf32, #tpu.memory_space<vmem>>, vector<16x32xf32>
      %17 = arith.addf %15, %16 : vector<16x32xf32>
      %c0_16 = arith.constant 0 : index
      %c0_17 = arith.constant 0 : index
      %18 = vector.load %arg7[%c0_16, %c0_17] : memref<16x32xf32, #tpu.memory_space<vmem>>, vector<16x32xf32>
      tpu.vector_store %arg7[%c0_16, %c0_17], %17 {strides = array<i32>} : memref<16x32xf32, #tpu.memory_space<vmem>>, vector<16x32xf32>,
    } else {
    }
    return
  }
  func.func @transform_0(%arg0: i32, %arg1: i32, %arg2: i32) -> (i32, i32) {
    %c0_i32 = arith.constant 0 : i32
    return %arg0, %arg2 : i32, i32
  }
  func.func @transform_1(%arg0: i32, %arg1: i32, %arg2: i32) -> (i32, i32) {
    %c0_i32 = arith.constant 0 : i32
    return %arg2, %arg1 : i32, i32
  }
  func.func @transform_2(%arg0: i32, %arg1: i32, %arg2: i32) -> (i32, i32) {
    %c0_i32 = arith.constant 0 : i32
    %c0_i32_0 = arith.constant 0 : i32
    return %c0_i32, %arg1 : i32, i32
  }
  func.func @transform_3(%arg0: i32, %arg1: i32, %arg2: i32) -> (i32, i32) {
    %c0_i32 = arith.constant 0 : i32
    return %arg0, %arg1 : i32, i32
  }
  func.func @transform_4(%arg0: i32, %arg1: i32, %arg2: i32) -> (i32, i32) {
    %c0_i32 = arith.constant 0 : i32
    return %arg0, %arg1 : i32, i32
  }
}

module attributes {stable_mosaic.version = 11 : i64} {
  func.func @_linear_kernel(%arg0: i32, %arg1: i32, %arg2: i32, %arg3: memref<16x32xf32, #tpu.memory_space<vmem>>, %arg4: memref<32x128xf32, #tpu.memory_space<vmem>>, %arg5: memref<1x128xf32, #tpu.memory_space<vmem>>, %arg6: memref<16x128xf32, #tpu.memory_space<vmem>>, %arg7: memref<16x128xf32, #tpu.memory_space<vmem>>) attributes {dimension_semantics = [#tpu.dimension_semantics<parallel>, #tpu.dimension_semantics<parallel>, #tpu.dimension_semantics<arbitrary>], iteration_bounds = array<i64: 1, 1, 1>, scalar_prefetch = 0 : i64, scratch_operands = 1 : i64, tpu.core_type = #tpu.core_type<tc>, window_params = [{transform_indices = @transform_0, window_bounds = array<i64: 16, 32>}, {transform_indices = @transform_1, window_bounds = array<i64: 32, 128>}, {transform_indices = @transform_2, window_bounds = array<i64: 1, 128>}, {transform_indices = @transform_3, window_bounds = array<i64: 16, 128>}]} {
    %c0_i32 = arith.constant 0 : i32
    %0 = arith.cmpi eq, %arg2, %c0_i32 : i32
    %1 = arith.extui %0 : i1 to i32
    %c0_i32_0 = arith.constant 0 : i32
    %2 = arith.cmpi ne, %1, %c0_i32_0 : i32
    scf.if %2 {
      %cst_10 = arith.constant 0.000000e+00 : f32
      %12 = vector.broadcast %cst_10 : f32 to vector<16x128xf32>
      %c0_11 = arith.constant 0 : index
      %c0_12 = arith.constant 0 : index
      %13 = vector.load %arg7[%c0_11, %c0_12] : memref<16x128xf32, #tpu.memory_space<vmem>>, vector<16x128xf32>
      tpu.vector_store %arg7[%c0_11, %c0_12], %12 {strides = array<i32>} : memref<16x128xf32, #tpu.memory_space<vmem>>, vector<16x128xf32>,
    } else {
    }
    %c0 = arith.constant 0 : index
    %c0_1 = arith.constant 0 : index
    %3 = vector.load %arg7[%c0, %c0_1] : memref<16x128xf32, #tpu.memory_space<vmem>>, vector<16x128xf32>
    %c0_2 = arith.constant 0 : index
    %c0_3 = arith.constant 0 : index
    %4 = vector.load %arg3[%c0_2, %c0_3] : memref<16x32xf32, #tpu.memory_space<vmem>>, vector<16x32xf32>
    %c0_4 = arith.constant 0 : index
    %c0_5 = arith.constant 0 : index
    %5 = vector.load %arg4[%c0_4, %c0_5] : memref<32x128xf32, #tpu.memory_space<vmem>>, vector<32x128xf32>
    %cst = arith.constant dense<0.000000e+00> : vector<16x128xf32>
    %6 = tpu.matmul %4, %5, %cst {dimension_numbers = #tpu.dot_dimension_numbers<[1], [0], [0], [1], [0, 0, 1, 1], [], []>} : vector<16x32xf32>, vector<32x128xf32>, vector<16x128xf32> -> vector<16x128xf32>
    %7 = arith.addf %3, %6 : vector<16x128xf32>
    %c0_6 = arith.constant 0 : index
    %c0_7 = arith.constant 0 : index
    %8 = vector.load %arg7[%c0_6, %c0_7] : memref<16x128xf32, #tpu.memory_space<vmem>>, vector<16x128xf32>
    tpu.vector_store %arg7[%c0_6, %c0_7], %7 {strides = array<i32>} : memref<16x128xf32, #tpu.memory_space<vmem>>, vector<16x128xf32>,
    %c0_i32_8 = arith.constant 0 : i32
    %9 = arith.cmpi eq, %arg2, %c0_i32_8 : i32
    %10 = arith.extui %9 : i1 to i32
    %c0_i32_9 = arith.constant 0 : i32
    %11 = arith.cmpi ne, %10, %c0_i32_9 : i32
    scf.if %11 {
      %c0_10 = arith.constant 0 : index
      %c0_11 = arith.constant 0 : index
      %12 = vector.load %arg7[%c0_10, %c0_11] : memref<16x128xf32, #tpu.memory_space<vmem>>, vector<16x128xf32>
      %c0_12 = arith.constant 0 : index
      %c0_13 = arith.constant 0 : index
      %13 = vector.load %arg5[%c0_12, %c0_13] : memref<1x128xf32, #tpu.memory_space<vmem>>, vector<1x128xf32>
      %14 = vector.broadcast %13 : vector<1x128xf32> to vector<16x128xf32>
      %15 = arith.addf %12, %14 : vector<16x128xf32>
      %16 = arith.mulf %15, %15 : vector<16x128xf32>
      %17 = arith.mulf %15, %16 : vector<16x128xf32>
      %cst_14 = arith.constant 4.471500e-02 : f32
      %18 = vector.broadcast %cst_14 : f32 to vector<16x128xf32>
      %19 = arith.mulf %18, %17 : vector<16x128xf32>
      %20 = arith.addf %15, %19 : vector<16x128xf32>
      %cst_15 = arith.constant 0.797884583 : f32
      %21 = vector.broadcast %cst_15 : f32 to vector<16x128xf32>
      %22 = arith.mulf %21, %20 : vector<16x128xf32>
      %23 = math.tanh %22 : vector<16x128xf32>
      %cst_16 = arith.constant 1.000000e+00 : f32
      %24 = vector.broadcast %cst_16 : f32 to vector<16x128xf32>
      %25 = arith.addf %24, %23 : vector<16x128xf32>
      %cst_17 = arith.constant 5.000000e-01 : f32
      %26 = vector.broadcast %cst_17 : f32 to vector<16x128xf32>
      %27 = arith.mulf %26, %25 : vector<16x128xf32>
      %28 = arith.mulf %15, %27 : vector<16x128xf32>
      %c0_18 = arith.constant 0 : index
      %c0_19 = arith.constant 0 : index
      %29 = vector.load %arg6[%c0_18, %c0_19] : memref<16x128xf32, #tpu.memory_space<vmem>>, vector<16x128xf32>
      tpu.vector_store %arg6[%c0_18, %c0_19], %28 {strides = array<i32>} : memref<16x128xf32, #tpu.memory_space<vmem>>, vector<16x128xf32>,
    } else {
    }
    return
  }
  func.func @transform_0(%arg0: i32, %arg1: i32, %arg2: i32) -> (i32, i32) {
    %c0_i32 = arith.constant 0 : i32
    return %arg0, %arg2 : i32, i32
  }
  func.func @transform_1(%arg0: i32, %arg1: i32, %arg2: i32) -> (i32, i32) {
    %c0_i32 = arith.constant 0 : i32
    return %arg2, %arg1 : i32, i32
  }
  func.func @transform_2(%arg0: i32, %arg1: i32, %arg2: i32) -> (i32, i32) {
    %c0_i32 = arith.constant 0 : i32
    %c0_i32_0 = arith.constant 0 : i32
    return %c0_i32, %arg1 : i32, i32
  }
  func.func @transform_3(%arg0: i32, %arg1: i32, %arg2: i32) -> (i32, i32) {
    %c0_i32 = arith.constant 0 : i32
    return %arg0, %arg1 : i32, i32
  }
}

module attributes {stable_mosaic.version = 11 : i64} {
  func.func @_linear_kernel(%arg0: i32, %arg1: i32, %arg2: i32, %arg3: memref<16x128xf32, #tpu.memory_space<vmem>>, %arg4: memref<128x32xf32, #tpu.memory_space<vmem>>, %arg5: memref<1x32xf32, #tpu.memory_space<vmem>>, %arg6: memref<16x32xf32, #tpu.memory_space<vmem>>, %arg7: memref<16x32xf32, #tpu.memory_space<vmem>>, %arg8: memref<16x32xf32, #tpu.memory_space<vmem>>) attributes {dimension_semantics = [#tpu.dimension_semantics<parallel>, #tpu.dimension_semantics<parallel>, #tpu.dimension_semantics<arbitrary>], iteration_bounds = array<i64: 1, 1, 1>, scalar_prefetch = 0 : i64, scratch_operands = 1 : i64, tpu.core_type = #tpu.core_type<tc>, window_params = [{transform_indices = @transform_0, window_bounds = array<i64: 16, 128>}, {transform_indices = @transform_1, window_bounds = array<i64: 128, 32>}, {transform_indices = @transform_2, window_bounds = array<i64: 1, 32>}, {transform_indices = @transform_3, window_bounds = array<i64: 16, 32>}, {transform_indices = @transform_4, window_bounds = array<i64: 16, 32>}]} {
    %c0_i32 = arith.constant 0 : i32
    %0 = arith.cmpi eq, %arg2, %c0_i32 : i32
    %1 = arith.extui %0 : i1 to i32
    %c0_i32_0 = arith.constant 0 : i32
    %2 = arith.cmpi ne, %1, %c0_i32_0 : i32
    scf.if %2 {
      %cst_10 = arith.constant 0.000000e+00 : f32
      %12 = vector.broadcast %cst_10 : f32 to vector<16x32xf32>
      %c0_11 = arith.constant 0 : index
      %c0_12 = arith.constant 0 : index
      %13 = vector.load %arg8[%c0_11, %c0_12] : memref<16x32xf32, #tpu.memory_space<vmem>>, vector<16x32xf32>
      tpu.vector_store %arg8[%c0_11, %c0_12], %12 {strides = array<i32>} : memref<16x32xf32, #tpu.memory_space<vmem>>, vector<16x32xf32>,
    } else {
    }
    %c0 = arith.constant 0 : index
    %c0_1 = arith.constant 0 : index
    %3 = vector.load %arg8[%c0, %c0_1] : memref<16x32xf32, #tpu.memory_space<vmem>>, vector<16x32xf32>
    %c0_2 = arith.constant 0 : index
    %c0_3 = arith.constant 0 : index
    %4 = vector.load %arg3[%c0_2, %c0_3] : memref<16x128xf32, #tpu.memory_space<vmem>>, vector<16x128xf32>
    %c0_4 = arith.constant 0 : index
    %c0_5 = arith.constant 0 : index
    %5 = vector.load %arg4[%c0_4, %c0_5] : memref<128x32xf32, #tpu.memory_space<vmem>>, vector<128x32xf32>
    %cst = arith.constant dense<0.000000e+00> : vector<16x32xf32>
    %6 = tpu.matmul %4, %5, %cst {dimension_numbers = #tpu.dot_dimension_numbers<[1], [0], [0], [1], [0, 0, 1, 1], [], []>} : vector<16x128xf32>, vector<128x32xf32>, vector<16x32xf32> -> vector<16x32xf32>
    %7 = arith.addf %3, %6 : vector<16x32xf32>
    %c0_6 = arith.constant 0 : index
    %c0_7 = arith.constant 0 : index
    %8 = vector.load %arg8[%c0_6, %c0_7] : memref<16x32xf32, #tpu.memory_space<vmem>>, vector<16x32xf32>
    tpu.vector_store %arg8[%c0_6, %c0_7], %7 {strides = array<i32>} : memref<16x32xf32, #tpu.memory_space<vmem>>, vector<16x32xf32>,
    %c0_i32_8 = arith.constant 0 : i32
    %9 = arith.cmpi eq, %arg2, %c0_i32_8 : i32
    %10 = arith.extui %9 : i1 to i32
    %c0_i32_9 = arith.constant 0 : i32
    %11 = arith.cmpi ne, %10, %c0_i32_9 : i32
    scf.if %11 {
      %c0_10 = arith.constant 0 : index
      %c0_11 = arith.constant 0 : index
      %12 = vector.load %arg8[%c0_10, %c0_11] : memref<16x32xf32, #tpu.memory_space<vmem>>, vector<16x32xf32>
      %c0_12 = arith.constant 0 : index
      %c0_13 = arith.constant 0 : index
      %13 = vector.load %arg5[%c0_12, %c0_13] : memref<1x32xf32, #tpu.memory_space<vmem>>, vector<1x32xf32>
      %14 = vector.broadcast %13 : vector<1x32xf32> to vector<16x32xf32>
      %15 = arith.addf %12, %14 : vector<16x32xf32>
      %c0_14 = arith.constant 0 : index
      %c0_15 = arith.constant 0 : index
      %16 = vector.load %arg6[%c0_14, %c0_15] : memref<16x32xf32, #tpu.memory_space<vmem>>, vector<16x32xf32>
      %17 = arith.addf %15, %16 : vector<16x32xf32>
      %c0_16 = arith.constant 0 : index
      %c0_17 = arith.constant 0 : index
      %18 = vector.load %arg7[%c0_16, %c0_17] : memref<16x32xf32, #tpu.memory_space<vmem>>, vector<16x32xf32>
      tpu.vector_store %arg7[%c0_16, %c0_17], %17 {strides = array<i32>} : memref<16x32xf32, #tpu.memory_space<vmem>>, vector<16x32xf32>,
    } else {
    }
    return
  }
  func.func @transform_0(%arg0: i32, %arg1: i32, %arg2: i32) -> (i32, i32) {
    %c0_i32 = arith.constant 0 : i32
    return %arg0, %arg2 : i32, i32
  }
  func.func @transform_1(%arg0: i32, %arg1: i32, %arg2: i32) -> (i32, i32) {
    %c0_i32 = arith.constant 0 : i32
    return %arg2, %arg1 : i32, i32
  }
  func.func @transform_2(%arg0: i32, %arg1: i32, %arg2: i32) -> (i32, i32) {
    %c0_i32 = arith.constant 0 : i32
    %c0_i32_0 = arith.constant 0 : i32
    return %c0_i32, %arg1 : i32, i32
  }
  func.func @transform_3(%arg0: i32, %arg1: i32, %arg2: i32) -> (i32, i32) {
    %c0_i32 = arith.constant 0 : i32
    return %arg0, %arg1 : i32, i32
  }
  func.func @transform_4(%arg0: i32, %arg1: i32, %arg2: i32) -> (i32, i32) {
    %c0_i32 = arith.constant 0 : i32
    return %arg0, %arg1 : i32, i32
  }
}

</mosaic_0001>

<llo_original>
// kernel: block_forward.7
$region0: #{block_forward.7}
  #allocation0 [shape = 'u32[]', space=smem, size = 0x4, offset = 0x4, fixed_abs, tag = 'smem constant byte address 0x4 - core index']
  #allocation1 [shape = 'u32[144,128]{1,0:T(1,128)}', space=vmem, size = 0x12000, scoped, tag = 'internal scratch']
  %s0 = inlined_call_operand.vmem [shape: f32[16,32], index: 0, kind: input, shape index: {}]
  %s1 = inlined_call_operand.vmem [shape: f32[1,32], index: 1, kind: input, shape index: {}]
  %s2 = inlined_call_operand.vmem [shape: f32[1,32], index: 2, kind: input, shape index: {}]
  %s3 = inlined_call_operand.vmem [shape: f32[16,32], index: 3, kind: output, shape index: {}]
  %s4 = sld [smem:[#allocation0]]
  $region22: #{block_forward.7} parent=0
    _
  %s6 = ssub.s32 1, %s4
  %s7 = scalar_select 0, %s6, %s4
  // Predicated region
  $region2: #{block_forward.7} parent=0 // pred_check
    _
  $region3: #{block_forward.7} parent=0 // pred_check_branch
    %9 = sbr.rel (0) target = $region5
  $region4: #{block_forward.7} parent=0 // pred_region
    _
  $region5: #{block_forward.7} parent=0 // pred_fallthru
    _
  // Predicated region
  $region6: #{block_forward.7} parent=0 // pred_check
    _
  $region7: #{block_forward.7} parent=0 // pred_check_branch
    %11 = sbr.rel (0) target = $region9
  $region8: #{block_forward.7} parent=0 // pred_region
    _
  $region9: #{block_forward.7} parent=0 // pred_fallthru
    _
  // Predicated region
  $region10: #{block_forward.7} parent=0 // pred_check
    _
  $region11: #{block_forward.7} parent=0 // pred_check_branch
    %13 = sbr.rel (0) target = $region13
  $region12: #{block_forward.7} parent=0 // pred_region
    _
  $region13: #{block_forward.7} parent=0 // pred_fallthru
    _
  %v14 = vld [vmem:[%s0] sm:$0xff]
  %v15 = vld [vmem:[%s0 + $0x8] sm:$0xff]
  %vm16 = vcmask 261120
  %v17 = vsel %vm16, %v14, 0.0
  %18 = vadd.xlane.f32.xlu0 %v17
  %v19 = vpop.xlane.xlu0 %18
  %v20 = vsel %vm16, %v15, 0.0
  %21 = vadd.xlane.f32.xlu0 %v20
  %v22 = vpop.xlane.xlu0 %21
  %v23 = vrcp.pop 32.0
  %v24 = vmul.f32 %v19, %v23
  %v25 = vmul.f32 %v22, %v23
  %v26 = vsub.f32 %v14, %v24
  %v27 = vsub.f32 %v15, %v25
  %v28 = vmul.f32 %v26, %v26
  %v29 = vmul.f32 %v27, %v27
  %v30 = vsel %vm16, %v28, 0.0
  %31 = vadd.xlane.f32.xlu0 %v30
  %v32 = vpop.xlane.xlu0 %31
  %v33 = vsel %vm16, %v29, 0.0
  %34 = vadd.xlane.f32.xlu0 %v33
  %v35 = vpop.xlane.xlu0 %34
  %v36 = vmul.f32 %v32, %v23
  %v37 = vmul.f32 %v35, %v23
  %v38 = vadd.f32 %v36, 1e-05
  %v39 = vadd.f32 %v37, 1e-05
  %v40 = vrsqrt.pop %v38
  %v41 = vrsqrt.pop %v39
  %v42 = vmul.f32 %v26, %v40
  %v43 = vmul.f32 %v27, %v41
  %v44 = vld [vmem:[%s1] sm:$0x1]
  %v46 = vlaneseq
  %v47 = vshrl.u32 %v46, 7
  %v48 = vsub.s32 0, %v47
  %v49 = vrot.slane %v44, %v48
  %v51 = vmul.f32 %v42, %v49
  %v52 = vmul.f32 %v43, %v49
  %v53 = vld [vmem:[%s2] sm:$0x1]
  %v55 = vlaneseq
  %v56 = vshrl.u32 %v55, 7
  %v57 = vsub.s32 0, %v56
  %v58 = vrot.slane %v53, %v57
  %v60 = vadd.f32 %v51, %v58
  %v61 = vadd.f32 %v52, %v58
  %62 = vst.msk [vmem:[%s3] sm:$0xff] %vm16, %v60
  %63 = vst.msk [vmem:[%s3 + $0x8] sm:$0xff] %vm16, %v61
  // Predicated region
  $region14: #{block_forward.7} parent=0 // pred_check
    _
  $region15: #{block_forward.7} parent=0 // pred_check_branch
    %65 = sbr.rel (0) target = $region17
  $region16: #{block_forward.7} parent=0 // pred_region
    _
  $region17: #{block_forward.7} parent=0 // pred_fallthru
    _
  // Predicated region
  $region18: #{block_forward.7} parent=0 // pred_check
    _
  $region19: #{block_forward.7} parent=0 // pred_check_branch
    %67 = sbr.rel (0) target = $region21
  $region20: #{block_forward.7} parent=0 // pred_region
    _
  $region21: #{block_forward.7} parent=0 // pred_fallthru
    _

// kernel: block_forward.8
$region0: #{block_forward.8}
  #allocation0 [shape = 'u32[]', space=smem, size = 0x4, offset = 0x4, fixed_abs, tag = 'smem constant byte address 0x4 - core index']
  #allocation1 [shape = 'u32[144,128]{1,0:T(1,128)}', space=vmem, size = 0x12000, scoped, tag = 'internal scratch']
  #allocation2 [shape = 'f32[16,96]{1,0:T(8,128)}', space=vmem, size = 0x2000, scoped, tag = 'scratch operand']
  %s0 = inlined_call_operand.vmem [shape: f32[16,32], index: 0, kind: input, shape index: {}]
  %s1 = inlined_call_operand.vmem [shape: f32[32,96], index: 1, kind: input, shape index: {}]
  %s2 = inlined_call_operand.vmem [shape: f32[1,96], index: 2, kind: input, shape index: {}]
  %s3 = inlined_call_operand.vmem [shape: f32[16,96], index: 3, kind: output, shape index: {}]
  %s4 = sld [smem:[#allocation0]]
  $region30: #{block_forward.8} parent=0
    _
  %s6 = ssub.s32 1, %s4
  %s7 = scalar_select 0, %s6, %s4
  // Predicated region
  $region2: #{block_forward.8} parent=0 // pred_check
    _
  $region3: #{block_forward.8} parent=0 // pred_check_branch
    %9 = sbr.rel (0) target = $region5
  $region4: #{block_forward.8} parent=0 // pred_region
    _
  $region5: #{block_forward.8} parent=0 // pred_fallthru
    _
  // Predicated region
  $region6: #{block_forward.8} parent=0 // pred_check
    _
  $region7: #{block_forward.8} parent=0 // pred_check_branch
    %11 = sbr.rel (0) target = $region9
  $region8: #{block_forward.8} parent=0 // pred_region
    _
  $region9: #{block_forward.8} parent=0 // pred_fallthru
    _
  // Predicated region
  $region10: #{block_forward.8} parent=0 // pred_check
    _
  $region11: #{block_forward.8} parent=0 // pred_check_branch
    %13 = sbr.rel (0) target = $region13
  $region12: #{block_forward.8} parent=0 // pred_region
    _
  $region13: #{block_forward.8} parent=0 // pred_fallthru
    _
  %p14 = scmp.eq.s32.totalorder 0, 0
  // Predicated region
  $region14: #{block_forward.8} parent=0 // pred_check
    %p15 = pneg %p14
  $region15: #{block_forward.8} parent=0 // pred_check_branch
    %17 = sbr.rel (%p15) target = $region17
  $region16: #{block_forward.8} parent=0 // pred_region
    %vm18 = vcmask 785408
    %19 = vst.msk [vmem:[#allocation2] sm:$0xff] %vm18, 0.0
    %20 = vst.msk [vmem:[#allocation2 + $0x8] sm:$0xff] %vm18, 0.0
  $region17: #{block_forward.8} parent=0 // pred_fallthru
    _
  %v21 = vld [vmem:[#allocation2] sm:$0xff]
  %v22 = vld [vmem:[#allocation2 + $0x8] sm:$0xff]
  %v23 = vld [vmem:[%s0] sm:$0xff]
  %v24 = vld [vmem:[%s0 + $0x8] sm:$0xff]
  %v25 = vld [vmem:[%s1] sm:$0xff]
  %v26 = vld [vmem:[%s1 + $0x8] sm:$0xff]
  %v27 = vld [vmem:[%s1 + $0x10] sm:$0xff]
  %v28 = vld [vmem:[%s1 + $0x18] sm:$0xff]
  %vm29 = vcmask 261120
  %v31 = vsel %vm29, %v23, 0
  %v34 = vsel %vm29, %v24, 0
  %36 = vmatprep.subr.mxu0 0.0
  %37 = vmatpush1.msra.mxu0 0.0
  %38 = vmatprep.subr.mxu0 0.0
  %39 = vmatpush1.msra.mxu0 0.0
  %40 = vmatprep.subr.mxu0 0.0
  %41 = vmatpush1.msra.mxu0 0.0
  %42 = vmatprep.subr.mxu0 0.0
  %43 = vmatpush1.msra.mxu0 0.0
  %44 = vmatprep.subr.mxu0 0.0
  %45 = vmatpush1.msra.mxu0 0.0
  %46 = vmatprep.subr.mxu0 0.0
  %47 = vmatpush1.msra.mxu0 0.0
  %48 = vmatprep.subr.mxu0 0.0
  %49 = vmatpush1.msra.mxu0 0.0
  %50 = vmatprep.subr.mxu0 0.0
  %51 = vmatpush1.msra.mxu0 0.0
  %52 = vmatprep.subr.mxu0 0.0
  %53 = vmatpush1.msra.mxu0 0.0
  %54 = vmatprep.subr.mxu0 0.0
  %55 = vmatpush1.msra.mxu0 0.0
  %56 = vmatprep.subr.mxu0 0.0
  %57 = vmatpush1.msra.mxu0 0.0
  %58 = vmatprep.subr.mxu0 0.0
  %59 = vmatpush1.msra.mxu0 0.0
  %60 = vmatprep.subr.mxu0 0.0
  %61 = vmatpush1.msra.mxu0 %v28
  %62 = vmatprep.subr.mxu0 0.0
  %63 = vmatpush1.msra.mxu0 %v27
  %64 = vmatprep.subr.mxu0 0.0
  %65 = vmatpush1.msra.mxu0 %v26
  %66 = vmatprep.subr.mxu0 0.0
  %67 = vmatpush1.msra.mxu0 %v25
  %68 = vmatprep.subr.mxu0 0.0
  %69 = vmatpush2.msra.mxu0 0.0
  %70 = vmatprep.subr.mxu0 0.0
  %71 = vmatpush2.msra.mxu0 0.0
  %72 = vmatprep.subr.mxu0 0.0
  %73 = vmatpush2.msra.mxu0 0.0
  %74 = vmatprep.subr.mxu0 0.0
  %75 = vmatpush2.msra.mxu0 0.0
  %76 = vmatprep.subr.mxu0 0.0
  %77 = vmatpush2.msra.mxu0 0.0
  %78 = vmatprep.subr.mxu0 0.0
  %79 = vmatpush2.msra.mxu0 0.0
  %80 = vmatprep.subr.mxu0 0.0
  %81 = vmatpush2.msra.mxu0 0.0
  %82 = vmatprep.subr.mxu0 0.0
  %83 = vmatpush2.msra.mxu0 0.0
  %84 = vmatprep.subr.mxu0 0.0
  %85 = vmatpush2.msra.mxu0 0.0
  %86 = vmatprep.subr.mxu0 0.0
  %87 = vmatpush2.msra.mxu0 0.0
  %88 = vmatprep.subr.mxu0 0.0
  %89 = vmatpush2.msra.mxu0 0.0
  %90 = vmatprep.subr.mxu0 0.0
  %91 = vmatpush2.msra.mxu0 0.0
  %92 = vmatprep.subr.mxu0 0.0
  %93 = vmatpush2.msra.mxu0 0.0
  %94 = vmatprep.subr.mxu0 0.0
  %95 = vmatpush2.msra.mxu0 0.0
  %96 = vmatprep.subr.mxu0 0.0
  %97 = vmatpush2.msra.mxu0 0.0
  %98 = vmatprep.subr.mxu0 0.0
  %99 = vmatpush2.msra.mxu0 0.0
  %100 = vmatprep.mubr.f32.mxu0 0.0
  %101 = vmatmul.mubr.f32.gmra.mxu0 %v31
  %v102 = vpop.f32.mrf.mxu0
  %v103 = vadd.f32 0.0, %v102
  %v104 = vpop.f32.mrf.mxu0
  %105 = vmatprep.mubr.f32.mxu0 0.0
  %106 = vmatmul.mubr.f32.gmra.mxu0 %v34
  %v107 = vpop.f32.mrf.mxu0
  %v108 = vadd.f32 0.0, %v107
  %v109 = vpop.f32.mrf.mxu0
  %110 = vdwg.mxu0
  %v111 = vadd.f32 %v21, %v103
  %v112 = vadd.f32 %v22, %v108
  %vm113 = vcmask 785408
  %114 = vst.msk [vmem:[#allocation2] sm:$0xff] %vm113, %v111
  %115 = vst.msk [vmem:[#allocation2 + $0x8] sm:$0xff] %vm113, %v112
  // Predicated region
  $region18: #{block_forward.8} parent=0 // pred_check
    %p116 = pneg %p14
  $region19: #{block_forward.8} parent=0 // pred_check_branch
    %118 = sbr.rel (%p116) target = $region21
  $region20: #{block_forward.8} parent=0 // pred_region
    %v119 = vld [vmem:[#allocation2] sm:$0xff]
    %v120 = vld [vmem:[#allocation2 + $0x8] sm:$0xff]
    %v121 = vld [vmem:[%s2] sm:$0x1]
    %v123 = vlaneseq
    %v124 = vshrl.u32 %v123, 7
    %v125 = vsub.s32 0, %v124
    %v126 = vrot.slane %v121, %v125
    %v128 = vadd.f32 %v119, %v126
    %v129 = vadd.f32 %v120, %v126
    %130 = vst.msk [vmem:[%s3] sm:$0xff] %vm113, %v128
    %131 = vst.msk [vmem:[%s3 + $0x8] sm:$0xff] %vm113, %v129
  $region21: #{block_forward.8} parent=0 // pred_fallthru
    _
  // Predicated region
  $region22: #{block_forward.8} parent=0 // pred_check
    _
  $region23: #{block_forward.8} parent=0 // pred_check_branch
    %133 = sbr.rel (0) target = $region25
  $region24: #{block_forward.8} parent=0 // pred_region
    _
  $region25: #{block_forward.8} parent=0 // pred_fallthru
    _
  // Predicated region
  $region26: #{block_forward.8} parent=0 // pred_check
    _
  $region27: #{block_forward.8} parent=0 // pred_check_branch
    %135 = sbr.rel (0) target = $region29
  $region28: #{block_forward.8} parent=0 // pred_region
    _
  $region29: #{block_forward.8} parent=0 // pred_fallthru
    _

// kernel: block_forward.10
$region0: #{block_forward.10}
  #allocation0 [shape = 'u32[]', space=smem, size = 0x4, offset = 0x4, fixed_abs, tag = 'smem constant byte address 0x4 - core index']
  #allocation1 [shape = 'u32[144,128]{1,0:T(1,128)}', space=vmem, size = 0x12000, scoped, tag = 'internal scratch']
  #allocation2 [shape = 'f32[16,32]{1,0:T(8,128)}', space=vmem, size = 0x2000, scoped, tag = 'scratch operand']
  %s0 = inlined_call_operand.vmem [shape: f32[16,32], index: 0, kind: input, shape index: {}]
  %s1 = inlined_call_operand.vmem [shape: f32[32,32], index: 1, kind: input, shape index: {}]
  %s2 = inlined_call_operand.vmem [shape: f32[1,32], index: 2, kind: input, shape index: {}]
  %s3 = inlined_call_operand.vmem [shape: f32[16,32], index: 3, kind: input, shape index: {}]
  %s4 = inlined_call_operand.vmem [shape: f32[16,32], index: 4, kind: output, shape index: {}]
  %s5 = sld [smem:[#allocation0]]
  $region34: #{block_forward.10} parent=0
    _
  %s7 = ssub.s32 1, %s5
  %s8 = scalar_select 0, %s7, %s5
  // Predicated region
  $region2: #{block_forward.10} parent=0 // pred_check
    _
  $region3: #{block_forward.10} parent=0 // pred_check_branch
    %10 = sbr.rel (0) target = $region5
  $region4: #{block_forward.10} parent=0 // pred_region
    _
  $region5: #{block_forward.10} parent=0 // pred_fallthru
    _
  // Predicated region
  $region6: #{block_forward.10} parent=0 // pred_check
    _
  $region7: #{block_forward.10} parent=0 // pred_check_branch
    %12 = sbr.rel (0) target = $region9
  $region8: #{block_forward.10} parent=0 // pred_region
    _
  $region9: #{block_forward.10} parent=0 // pred_fallthru
    _
  // Predicated region
  $region10: #{block_forward.10} parent=0 // pred_check
    _
  $region11: #{block_forward.10} parent=0 // pred_check_branch
    %14 = sbr.rel (0) target = $region13
  $region12: #{block_forward.10} parent=0 // pred_region
    _
  $region13: #{block_forward.10} parent=0 // pred_fallthru
    _
  // Predicated region
  $region14: #{block_forward.10} parent=0 // pred_check
    _
  $region15: #{block_forward.10} parent=0 // pred_check_branch
    %16 = sbr.rel (0) target = $region17
  $region16: #{block_forward.10} parent=0 // pred_region
    _
  $region17: #{block_forward.10} parent=0 // pred_fallthru
    _
  %p17 = scmp.eq.s32.totalorder 0, 0
  // Predicated region
  $region18: #{block_forward.10} parent=0 // pred_check
    %p18 = pneg %p17
  $region19: #{block_forward.10} parent=0 // pred_check_branch
    %20 = sbr.rel (%p18) target = $region21
  $region20: #{block_forward.10} parent=0 // pred_region
    %vm21 = vcmask 261120
    %22 = vst.msk [vmem:[#allocation2] sm:$0xff] %vm21, 0.0
    %23 = vst.msk [vmem:[#allocation2 + $0x8] sm:$0xff] %vm21, 0.0
  $region21: #{block_forward.10} parent=0 // pred_fallthru
    _
  %v24 = vld [vmem:[#allocation2] sm:$0xff]
  %v25 = vld [vmem:[#allocation2 + $0x8] sm:$0xff]
  %v26 = vld [vmem:[%s0] sm:$0xff]
  %v27 = vld [vmem:[%s0 + $0x8] sm:$0xff]
  %v28 = vld [vmem:[%s1] sm:$0xff]
  %v29 = vld [vmem:[%s1 + $0x8] sm:$0xff]
  %v30 = vld [vmem:[%s1 + $0x10] sm:$0xff]
  %v31 = vld [vmem:[%s1 + $0x18] sm:$0xff]
  %vm32 = vcmask 261120
  %v34 = vsel %vm32, %v26, 0
  %v37 = vsel %vm32, %v27, 0
  %39 = vmatprep.subr.mxu0 0.0
  %40 = vmatpush1.msra.mxu0 0.0
  %41 = vmatprep.subr.mxu0 0.0
  %42 = vmatpush1.msra.mxu0 0.0
  %43 = vmatprep.subr.mxu0 0.0
  %44 = vmatpush1.msra.mxu0 0.0
  %45 = vmatprep.subr.mxu0 0.0
  %46 = vmatpush1.msra.mxu0 0.0
  %47 = vmatprep.subr.mxu0 0.0
  %48 = vmatpush1.msra.mxu0 0.0
  %49 = vmatprep.subr.mxu0 0.0
  %50 = vmatpush1.msra.mxu0 0.0
  %51 = vmatprep.subr.mxu0 0.0
  %52 = vmatpush1.msra.mxu0 0.0
  %53 = vmatprep.subr.mxu0 0.0
  %54 = vmatpush1.msra.mxu0 0.0
  %55 = vmatprep.subr.mxu0 0.0
  %56 = vmatpush1.msra.mxu0 0.0
  %57 = vmatprep.subr.mxu0 0.0
  %58 = vmatpush1.msra.mxu0 0.0
  %59 = vmatprep.subr.mxu0 0.0
  %60 = vmatpush1.msra.mxu0 0.0
  %61 = vmatprep.subr.mxu0 0.0
  %62 = vmatpush1.msra.mxu0 0.0
  %63 = vmatprep.subr.mxu0 0.0
  %64 = vmatpush1.msra.mxu0 %v31
  %65 = vmatprep.subr.mxu0 0.0
  %66 = vmatpush1.msra.mxu0 %v30
  %67 = vmatprep.subr.mxu0 0.0
  %68 = vmatpush1.msra.mxu0 %v29
  %69 = vmatprep.subr.mxu0 0.0
  %70 = vmatpush1.msra.mxu0 %v28
  %71 = vmatprep.subr.mxu0 0.0
  %72 = vmatpush2.msra.mxu0 0.0
  %73 = vmatprep.subr.mxu0 0.0
  %74 = vmatpush2.msra.mxu0 0.0
  %75 = vmatprep.subr.mxu0 0.0
  %76 = vmatpush2.msra.mxu0 0.0
  %77 = vmatprep.subr.mxu0 0.0
  %78 = vmatpush2.msra.mxu0 0.0
  %79 = vmatprep.subr.mxu0 0.0
  %80 = vmatpush2.msra.mxu0 0.0
  %81 = vmatprep.subr.mxu0 0.0
  %82 = vmatpush2.msra.mxu0 0.0
  %83 = vmatprep.subr.mxu0 0.0
  %84 = vmatpush2.msra.mxu0 0.0
  %85 = vmatprep.subr.mxu0 0.0
  %86 = vmatpush2.msra.mxu0 0.0
  %87 = vmatprep.subr.mxu0 0.0
  %88 = vmatpush2.msra.mxu0 0.0
  %89 = vmatprep.subr.mxu0 0.0
  %90 = vmatpush2.msra.mxu0 0.0
  %91 = vmatprep.subr.mxu0 0.0
  %92 = vmatpush2.msra.mxu0 0.0
  %93 = vmatprep.subr.mxu0 0.0
  %94 = vmatpush2.msra.mxu0 0.0
  %95 = vmatprep.subr.mxu0 0.0
  %96 = vmatpush2.msra.mxu0 0.0
  %97 = vmatprep.subr.mxu0 0.0
  %98 = vmatpush2.msra.mxu0 0.0
  %99 = vmatprep.subr.mxu0 0.0
  %100 = vmatpush2.msra.mxu0 0.0
  %101 = vmatprep.subr.mxu0 0.0
  %102 = vmatpush2.msra.mxu0 0.0
  %103 = vmatprep.mubr.f32.mxu0 0.0
  %104 = vmatmul.mubr.f32.gmra.mxu0 %v34
  %v105 = vpop.f32.mrf.mxu0
  %v106 = vadd.f32 0.0, %v105
  %v107 = vpop.f32.mrf.mxu0
  %108 = vmatprep.mubr.f32.mxu0 0.0
  %109 = vmatmul.mubr.f32.gmra.mxu0 %v37
  %v110 = vpop.f32.mrf.mxu0
  %v111 = vadd.f32 0.0, %v110
  %v112 = vpop.f32.mrf.mxu0
  %113 = vdwg.mxu0
  %v114 = vadd.f32 %v24, %v106
  %v115 = vadd.f32 %v25, %v111
  %116 = vst.msk [vmem:[#allocation2] sm:$0xff] %vm32, %v114
  %117 = vst.msk [vmem:[#allocation2 + $0x8] sm:$0xff] %vm32, %v115
  // Predicated region
  $region22: #{block_forward.10} parent=0 // pred_check
    %p118 = pneg %p17
  $region23: #{block_forward.10} parent=0 // pred_check_branch
    %120 = sbr.rel (%p118) target = $region25
  $region24: #{block_forward.10} parent=0 // pred_region
    %v121 = vld [vmem:[#allocation2] sm:$0xff]
    %v122 = vld [vmem:[#allocation2 + $0x8] sm:$0xff]
    %v123 = vld [vmem:[%s2] sm:$0x1]
    %v125 = vlaneseq
    %v126 = vshrl.u32 %v125, 7
    %v127 = vsub.s32 0, %v126
    %v128 = vrot.slane %v123, %v127
    %v130 = vadd.f32 %v121, %v128
    %v131 = vadd.f32 %v122, %v128
    %v132 = vld [vmem:[%s3] sm:$0xff]
    %v133 = vld [vmem:[%s3 + $0x8] sm:$0xff]
    %v134 = vadd.f32 %v130, %v132
    %v135 = vadd.f32 %v131, %v133
    %136 = vst.msk [vmem:[%s4] sm:$0xff] %vm32, %v134
    %137 = vst.msk [vmem:[%s4 + $0x8] sm:$0xff] %vm32, %v135
  $region25: #{block_forward.10} parent=0 // pred_fallthru
    _
  // Predicated region
  $region26: #{block_forward.10} parent=0 // pred_check
    _
  $region27: #{block_forward.10} parent=0 // pred_check_branch
    %139 = sbr.rel (0) target = $region29
  $region28: #{block_forward.10} parent=0 // pred_region
    _
  $region29: #{block_forward.10} parent=0 // pred_fallthru
    _
  // Predicated region
  $region30: #{block_forward.10} parent=0 // pred_check
    _
  $region31: #{block_forward.10} parent=0 // pred_check_branch
    %141 = sbr.rel (0) target = $region33
  $region32: #{block_forward.10} parent=0 // pred_region
    _
  $region33: #{block_forward.10} parent=0 // pred_fallthru
    _

// kernel: block_forward.9
$region0: #{block_forward.9}
  #allocation0 [shape = 'u32[]', space=smem, size = 0x4, offset = 0x4, fixed_abs, tag = 'smem constant byte address 0x4 - core index']
  #allocation1 [shape = 'u32[144,128]{1,0:T(1,128)}', space=vmem, size = 0x12000, scoped, tag = 'internal scratch']
  %s0 = inlined_call_operand.vmem [shape: f32[2,8,96], index: 0, kind: input, shape index: {}]
  %s1 = inlined_call_operand.vmem [shape: f32[2,8,32], index: 1, kind: output, shape index: {}]
  %s2 = sld [smem:[#allocation0]]
  $region37: #{block_forward.9} parent=0
    _
  %s4 = ssub.s32 1, %s2
  %s5 = scalar_select 0, %s4, %s2
  loop: start=0, step=1, limit=4
  $region2: #{block_forward.9} parent=0 // loop_pre_header
    _
  $region3: #{block_forward.9} parent=0 // loop_header
    %s7 = sphi 0, %s11
    %p8 = scmp.ge.s32.totalorder %s7, 4
    %s17 = sphi 0, %s19
    %s20 = sphi 0, %s17
    %s21 = sphi 0, %s20
    %s37 = sphi 0, %s21
    %s43 = sphi 0, %s45
    %s46 = sphi 0, %s43
    %s47 = sphi 0, %s46
    %s63 = sphi 0, %s47
  $region4: #{block_forward.9} parent=0 // loop_header_branch
    %10 = sbr.rel (%p8) target = $region8
  $region5: #{block_forward.9} parent=0 // loop_body
    %s12 = ssub.s32 %s7, 1
    %s13 = ssub.s32 %s7, 2
    %s14 = sadd.s32 %s7, 1
    %s15 = ssub.s32 %s7, %s14
    %p16 = scmp.eq.s32.totalorder %s15, 0
    %s18 = sadd.s32 %s17, 1
    %s19 = scalar_select %p16, %s17, %s18
    %p22 = pneg %p16
    %p23 = scmp.eq.s32.totalorder %s7, 1
    %p24 = por %p22, %p23
    %p25 = scmp.ne.s32.totalorder %s17, %s20
    %p26 = scmp.eq.s32.totalorder %s7, 0
    %p27 = por %p25, %p26
    %p28 = scmp.ne.s32.totalorder %s17, %s20
    %p29 = scmp.eq.s32.totalorder %s12, 1
    %p30 = por %p28, %p29
    %p31 = scmp.ne.s32.totalorder %s20, %s21
    %p32 = scmp.eq.s32.totalorder %s12, 0
    %p33 = por %p31, %p32
    %p34 = scmp.ne.s32.totalorder %s20, %s21
    %p35 = scmp.eq.s32.totalorder %s13, 1
    %p36 = por %p34, %p35
    %p38 = scmp.ne.s32.totalorder %s21, %s37
    %p39 = scmp.eq.s32.totalorder %s13, 0
    %p40 = por %p38, %p39
    %s41 = ssub.s32 %s7, %s14
    %p42 = scmp.eq.s32.totalorder %s41, 0
    %s44 = sadd.s32 %s43, 1
    %s45 = scalar_select %p42, %s43, %s44
    %p48 = pneg %p42
    %p49 = scmp.eq.s32.totalorder %s7, 1
    %p50 = por %p48, %p49
    %p51 = scmp.ne.s32.totalorder %s43, %s46
    %p52 = scmp.eq.s32.totalorder %s7, 0
    %p53 = por %p51, %p52
    %p54 = scmp.ne.s32.totalorder %s43, %s46
    %p55 = scmp.eq.s32.totalorder %s12, 1
    %p56 = por %p54, %p55
    %p57 = scmp.ne.s32.totalorder %s46, %s47
    %p58 = scmp.eq.s32.totalorder %s12, 0
    %p59 = por %p57, %p58
    %p60 = scmp.ne.s32.totalorder %s46, %s47
    %p61 = scmp.eq.s32.totalorder %s13, 1
    %p62 = por %p60, %p61
    %p64 = scmp.ne.s32.totalorder %s47, %s63
    %p65 = scmp.eq.s32.totalorder %s13, 0
    %p66 = por %p64, %p65
    %p67 = scmp.le.s32.totalorder 1, %s7
    %p68 = scmp.lt.s32.totalorder %s7, 3
    %p69 = pnand %p67, %p68
    %p70 = pneg %p69
    // Predicated region
    $region9: #{block_forward.9} parent=5 // pred_check
      _
    $region10: #{block_forward.9} parent=5 // pred_check_branch
      %72 = sbr.rel (%p69) target = $region12
    $region11: #{block_forward.9} parent=5 // pred_region
      %s73 = ssub.s32 %s7, 1
    $region12: #{block_forward.9} parent=5 // pred_fallthru
      _
    %p74 = scmp.lt.s32.totalorder %s7, 2
    // Predicated region
    $region13: #{block_forward.9} parent=5 // pred_check
      %p75 = pneg %p74
    $region14: #{block_forward.9} parent=5 // pred_check_branch
      %77 = sbr.rel (%p75) target = $region16
    $region15: #{block_forward.9} parent=5 // pred_region
      // Predicated region
      $region17: #{block_forward.9} parent=15 // pred_check
        %p78 = pneg %p27
      $region18: #{block_forward.9} parent=15 // pred_check_branch
        %80 = sbr.rel (%p78) target = $region20
      $region19: #{block_forward.9} parent=15 // pred_region
        %p81 = scmp.lt.s32.totalorder %s7, 1
        %s82 = scalar_select %p81, %s7, 1
        %s83 = smul.addr %s82, 8
        %s84 = scalar_lea.vmem %s0, %s83
      $region20: #{block_forward.9} parent=15 // pred_fallthru
        _
    $region16: #{block_forward.9} parent=5 // pred_fallthru
      _
    %p85 = scmp.le.s32.totalorder 1, %s7
    %p86 = scmp.lt.s32.totalorder %s7, 3
    %p87 = pnand %p85, %p86
    %p88 = pneg %p87
    // Predicated region
    $region21: #{block_forward.9} parent=5 // pred_check
      _
    $region22: #{block_forward.9} parent=5 // pred_check_branch
      %90 = sbr.rel (%p87) target = $region24
    $region23: #{block_forward.9} parent=5 // pred_region
      %s91 = ssub.s32 %s7, 1
      %p92 = scmp.lt.s32.totalorder %s12, 1
      %s93 = scalar_select %p92, %s12, 1
      %s94 = smul.addr %s93, 8
      %s95 = scalar_lea.vmem %s0, %s94
      %p96 = pneg %p33
      %p97 = pneg %p30
      %p98 = pneg %p59
      %p99 = pneg %p56
      %p100 = scmp.lt.s32.totalorder %s12, 1
      %s101 = scalar_select %p100, %s12, 1
      %s102 = smul.addr %s101, 8
      %s103 = scalar_lea.vmem %s1, %s102
      %p104 = scmp.lt.s32.totalorder %s12, 1
      %s105 = scalar_select %p104, %s12, 1
      %s106 = smul.addr %s105, 8
      %s107 = scalar_lea.vmem %s0, %s106
      %p108 = scmp.lt.s32.totalorder %s12, 1
      %s109 = scalar_select %p108, %s12, 1
      %s110 = smul.addr %s109, 8
      %s111 = scalar_lea.vmem %s1, %s110
      %v112 = vlaneseq
      %v113 = vshrl.u32 %v112, 7
      %v114 = vlaneseq
      %v115 = vand.u32 %v114, 127
      %vm116 = vcmp.ge.s32.totalorder %v113, %v115
      %v117 = vld [vmem:[%s107] sm:$0xff]
      %v118 = vmul.f32 %v117, 0.35355338
      %120 = vrot.lane.b32.xlu0 %v117, 96
      %v121 = vpop.permute.xlu0 %120
      %vm122 = vcmask 64512
      %v124 = vsel %vm122, %v118, 0
      %v126 = vsel %vm122, %v121, 0
      %128 = vmatprep.subr.mxu0 0.0
      %129 = vmatpush1.xpose.msra.mxu0 0.0
      %130 = vmatprep.subr.mxu0 0.0
      %131 = vmatpush1.xpose.msra.mxu0 0.0
      %132 = vmatprep.subr.mxu0 0.0
      %133 = vmatpush1.xpose.msra.mxu0 0.0
      %134 = vmatprep.subr.mxu0 0.0
      %135 = vmatpush1.xpose.msra.mxu0 0.0
      %136 = vmatprep.subr.mxu0 0.0
      %137 = vmatpush1.xpose.msra.mxu0 0.0
      %138 = vmatprep.subr.mxu0 0.0
      %139 = vmatpush1.xpose.msra.mxu0 0.0
      %140 = vmatprep.subr.mxu0 0.0
      %141 = vmatpush1.xpose.msra.mxu0 0.0
      %142 = vmatprep.subr.mxu0 0.0
      %143 = vmatpush1.xpose.msra.mxu0 0.0
      %144 = vmatprep.subr.mxu0 0.0
      %145 = vmatpush1.xpose.msra.mxu0 0.0
      %146 = vmatprep.subr.mxu0 0.0
      %147 = vmatpush1.xpose.msra.mxu0 0.0
      %148 = vmatprep.subr.mxu0 0.0
      %149 = vmatpush1.xpose.msra.mxu0 0.0
      %150 = vmatprep.subr.mxu0 0.0
      %151 = vmatpush1.xpose.msra.mxu0 0.0
      %152 = vmatprep.subr.mxu0 0.0
      %153 = vmatpush1.xpose.msra.mxu0 0.0
      %154 = vmatprep.subr.mxu0 0.0
      %155 = vmatpush1.xpose.msra.mxu0 0.0
      %156 = vmatprep.subr.mxu0 0.0
      %157 = vmatpush1.xpose.msra.mxu0 0.0
      %158 = vmatprep.subr.mxu0 0.0
      %159 = vmatpush1.xpose.msra.mxu0 %v126
      %160 = vmatprep.subr.mxu0 0.0
      %161 = vmatpush2.xpose.msra.mxu0 0.0
      %162 = vmatprep.subr.mxu0 0.0
      %163 = vmatpush2.xpose.msra.mxu0 0.0
      %164 = vmatprep.subr.mxu0 0.0
      %165 = vmatpush2.xpose.msra.mxu0 0.0
      %166 = vmatprep.subr.mxu0 0.0
      %167 = vmatpush2.xpose.msra.mxu0 0.0
      %168 = vmatprep.subr.mxu0 0.0
      %169 = vmatpush2.xpose.msra.mxu0 0.0
      %170 = vmatprep.subr.mxu0 0.0
      %171 = vmatpush2.xpose.msra.mxu0 0.0
      %172 = vmatprep.subr.mxu0 0.0
      %173 = vmatpush2.xpose.msra.mxu0 0.0
      %174 = vmatprep.subr.mxu0 0.0
      %175 = vmatpush2.xpose.msra.mxu0 0.0
      %176 = vmatprep.subr.mxu0 0.0
      %177 = vmatpush2.xpose.msra.mxu0 0.0
      %178 = vmatprep.subr.mxu0 0.0
      %179 = vmatpush2.xpose.msra.mxu0 0.0
      %180 = vmatprep.subr.mxu0 0.0
      %181 = vmatpush2.xpose.msra.mxu0 0.0
      %182 = vmatprep.subr.mxu0 0.0
      %183 = vmatpush2.xpose.msra.mxu0 0.0
      %184 = vmatprep.subr.mxu0 0.0
      %185 = vmatpush2.xpose.msra.mxu0 0.0
      %186 = vmatprep.subr.mxu0 0.0
      %187 = vmatpush2.xpose.msra.mxu0 0.0
      %188 = vmatprep.subr.mxu0 0.0
      %189 = vmatpush2.xpose.msra.mxu0 0.0
      %190 = vmatprep.subr.mxu0 0.0
      %191 = vmatpush2.xpose.msra.mxu0 0.0
      %192 = vmatprep.mubr.f32.mxu0 0.0
      %193 = vmatmul.mubr.f32.gmra.mxu0 %v124
      %v194 = vpop.f32.mrf.mxu0
      %v195 = vadd.f32 0.0, %v194
      %v196 = vpop.f32.mrf.mxu0
      %197 = vdwg.mxu0
      %v198 = vsel %vm116, %v195, -inf
      %v199 = vsel %vm122, %v198, -inf
      %200 = vmax.xlane.f32.xlu0 %v199
      %v201 = vpop.xlane.xlu0 %200
      %v202 = vsub.f32 %v198, %v201
      %v203 = vmul.f32 %v202, 1.442695
      %v204 = vpow.pop %v203
      %v205 = vsel %vm122, %v204, 0.0
      %206 = vadd.xlane.f32.xlu0 %v205
      %v207 = vpop.xlane.xlu0 %206
      %208 = vrot.lane.b32.xlu0 %v117, 64
      %v209 = vpop.permute.xlu0 %208
      %v212 = vsel %vm122, %v204, 0
      %214 = vmatprep.subr.mxu0 0.0
      %215 = vmatpush1.msra.mxu0 0.0
      %216 = vmatprep.subr.mxu0 0.0
      %217 = vmatpush1.msra.mxu0 0.0
      %218 = vmatprep.subr.mxu0 0.0
      %219 = vmatpush1.msra.mxu0 0.0
      %220 = vmatprep.subr.mxu0 0.0
      %221 = vmatpush1.msra.mxu0 0.0
      %222 = vmatprep.subr.mxu0 0.0
      %223 = vmatpush1.msra.mxu0 0.0
      %224 = vmatprep.subr.mxu0 0.0
      %225 = vmatpush1.msra.mxu0 0.0
      %226 = vmatprep.subr.mxu0 0.0
      %227 = vmatpush1.msra.mxu0 0.0
      %228 = vmatprep.subr.mxu0 0.0
      %229 = vmatpush1.msra.mxu0 0.0
      %230 = vmatprep.subr.mxu0 0.0
      %231 = vmatpush1.msra.mxu0 0.0
      %232 = vmatprep.subr.mxu0 0.0
      %233 = vmatpush1.msra.mxu0 0.0
      %234 = vmatprep.subr.mxu0 0.0
      %235 = vmatpush1.msra.mxu0 0.0
      %236 = vmatprep.subr.mxu0 0.0
      %237 = vmatpush1.msra.mxu0 0.0
      %238 = vmatprep.subr.mxu0 0.0
      %239 = vmatpush1.msra.mxu0 0.0
      %240 = vmatprep.subr.mxu0 0.0
      %241 = vmatpush1.msra.mxu0 0.0
      %242 = vmatprep.subr.mxu0 0.0
      %243 = vmatpush1.msra.mxu0 0.0
      %244 = vmatprep.subr.mxu0 0.0
      %245 = vmatpush1.msra.mxu0 %v209
      %246 = vmatprep.subr.mxu0 0.0
      %247 = vmatpush2.msra.mxu0 0.0
      %248 = vmatprep.subr.mxu0 0.0
      %249 = vmatpush2.msra.mxu0 0.0
      %250 = vmatprep.subr.mxu0 0.0
      %251 = vmatpush2.msra.mxu0 0.0
      %252 = vmatprep.subr.mxu0 0.0
      %253 = vmatpush2.msra.mxu0 0.0
      %254 = vmatprep.subr.mxu0 0.0
      %255 = vmatpush2.msra.mxu0 0.0
      %256 = vmatprep.subr.mxu0 0.0
      %257 = vmatpush2.msra.mxu0 0.0
      %258 = vmatprep.subr.mxu0 0.0
      %259 = vmatpush2.msra.mxu0 0.0
      %260 = vmatprep.subr.mxu0 0.0
      %261 = vmatpush2.msra.mxu0 0.0
      %262 = vmatprep.subr.mxu0 0.0
      %263 = vmatpush2.msra.mxu0 0.0
      %264 = vmatprep.subr.mxu0 0.0
      %265 = vmatpush2.msra.mxu0 0.0
      %266 = vmatprep.subr.mxu0 0.0
      %267 = vmatpush2.msra.mxu0 0.0
      %268 = vmatprep.subr.mxu0 0.0
      %269 = vmatpush2.msra.mxu0 0.0
      %270 = vmatprep.subr.mxu0 0.0
      %271 = vmatpush2.msra.mxu0 0.0
      %272 = vmatprep.subr.mxu0 0.0
      %273 = vmatpush2.msra.mxu0 0.0
      %274 = vmatprep.subr.mxu0 0.0
      %275 = vmatpush2.msra.mxu0 0.0
      %276 = vmatprep.subr.mxu0 0.0
      %277 = vmatpush2.msra.mxu0 0.0
      %278 = vmatprep.mubr.f32.mxu0 0.0
      %279 = vmatmul.mubr.f32.gmra.mxu0 %v212
      %v280 = vpop.f32.mrf.mxu0
      %v281 = vadd.f32 0.0, %v280
      %v282 = vpop.f32.mrf.mxu0
      %283 = vdwg.mxu0
      %v284 = vrcp.pop %v207
      %v285 = vmul.f32 %v281, %v284
      %286 = vrot.lane.b32.xlu0 %v118, 120
      %v287 = vpop.permute.xlu0 %286
      %288 = vrot.lane.b32.xlu0 %v117, 88
      %v289 = vpop.permute.xlu0 %288
      %v290 = vsel %vm122, %v287, 0
      %v292 = vsel %vm122, %v289, 0
      %294 = vmatprep.subr.mxu0 0.0
      %295 = vmatpush1.xpose.msra.mxu0 0.0
      %296 = vmatprep.subr.mxu0 0.0
      %297 = vmatpush1.xpose.msra.mxu0 0.0
      %298 = vmatprep.subr.mxu0 0.0
      %299 = vmatpush1.xpose.msra.mxu0 0.0
      %300 = vmatprep.subr.mxu0 0.0
      %301 = vmatpush1.xpose.msra.mxu0 0.0
      %302 = vmatprep.subr.mxu0 0.0
      %303 = vmatpush1.xpose.msra.mxu0 0.0
      %304 = vmatprep.subr.mxu0 0.0
      %305 = vmatpush1.xpose.msra.mxu0 0.0
      %306 = vmatprep.subr.mxu0 0.0
      %307 = vmatpush1.xpose.msra.mxu0 0.0
      %308 = vmatprep.subr.mxu0 0.0
      %309 = vmatpush1.xpose.msra.mxu0 0.0
      %310 = vmatprep.subr.mxu0 0.0
      %311 = vmatpush1.xpose.msra.mxu0 0.0
      %312 = vmatprep.subr.mxu0 0.0
      %313 = vmatpush1.xpose.msra.mxu0 0.0
      %314 = vmatprep.subr.mxu0 0.0
      %315 = vmatpush1.xpose.msra.mxu0 0.0
      %316 = vmatprep.subr.mxu0 0.0
      %317 = vmatpush1.xpose.msra.mxu0 0.0
      %318 = vmatprep.subr.mxu0 0.0
      %319 = vmatpush1.xpose.msra.mxu0 0.0
      %320 = vmatprep.subr.mxu0 0.0
      %321 = vmatpush1.xpose.msra.mxu0 0.0
      %322 = vmatprep.subr.mxu0 0.0
      %323 = vmatpush1.xpose.msra.mxu0 0.0
      %324 = vmatprep.subr.mxu0 0.0
      %325 = vmatpush1.xpose.msra.mxu0 %v292
      %326 = vmatprep.subr.mxu0 0.0
      %327 = vmatpush2.xpose.msra.mxu0 0.0
      %328 = vmatprep.subr.mxu0 0.0
      %329 = vmatpush2.xpose.msra.mxu0 0.0
      %330 = vmatprep.subr.mxu0 0.0
      %331 = vmatpush2.xpose.msra.mxu0 0.0
      %332 = vmatprep.subr.mxu0 0.0
      %333 = vmatpush2.xpose.msra.mxu0 0.0
      %334 = vmatprep.subr.mxu0 0.0
      %335 = vmatpush2.xpose.msra.mxu0 0.0
      %336 = vmatprep.subr.mxu0 0.0
      %337 = vmatpush2.xpose.msra.mxu0 0.0
      %338 = vmatprep.subr.mxu0 0.0
      %339 = vmatpush2.xpose.msra.mxu0 0.0
      %340 = vmatprep.subr.mxu0 0.0
      %341 = vmatpush2.xpose.msra.mxu0 0.0
      %342 = vmatprep.subr.mxu0 0.0
      %343 = vmatpush2.xpose.msra.mxu0 0.0
      %344 = vmatprep.subr.mxu0 0.0
      %345 = vmatpush2.xpose.msra.mxu0 0.0
      %346 = vmatprep.subr.mxu0 0.0
      %347 = vmatpush2.xpose.msra.mxu0 0.0
      %348 = vmatprep.subr.mxu0 0.0
      %349 = vmatpush2.xpose.msra.mxu0 0.0
      %350 = vmatprep.subr.mxu0 0.0
      %351 = vmatpush2.xpose.msra.mxu0 0.0
      %352 = vmatprep.subr.mxu0 0.0
      %353 = vmatpush2.xpose.msra.mxu0 0.0
      %354 = vmatprep.subr.mxu0 0.0
      %355 = vmatpush2.xpose.msra.mxu0 0.0
      %356 = vmatprep.subr.mxu0 0.0
      %357 = vmatpush2.xpose.msra.mxu0 0.0
      %358 = vmatprep.mubr.f32.mxu0 0.0
      %359 = vmatmul.mubr.f32.gmra.mxu0 %v290
      %v360 = vpop.f32.mrf.mxu0
      %v361 = vadd.f32 0.0, %v360
      %v362 = vpop.f32.mrf.mxu0
      %363 = vdwg.mxu0
      %v364 = vsel %vm116, %v361, -inf
      %v365 = vsel %vm122, %v364, -inf
      %366 = vmax.xlane.f32.xlu0 %v365
      %v367 = vpop.xlane.xlu0 %366
      %v368 = vsub.f32 %v364, %v367
      %v369 = vmul.f32 %v368, 1.442695
      %v370 = vpow.pop %v369
      %v371 = vsel %vm122, %v370, 0.0
      %372 = vadd.xlane.f32.xlu0 %v371
      %v373 = vpop.xlane.xlu0 %372
      %374 = vrot.lane.b32.xlu0 %v117, 56
      %v375 = vpop.permute.xlu0 %374
      %v378 = vsel %vm122, %v370, 0
      %380 = vmatprep.subr.mxu0 0.0
      %381 = vmatpush1.msra.mxu0 0.0
      %382 = vmatprep.subr.mxu0 0.0
      %383 = vmatpush1.msra.mxu0 0.0
      %384 = vmatprep.subr.mxu0 0.0
      %385 = vmatpush1.msra.mxu0 0.0
      %386 = vmatprep.subr.mxu0 0.0
      %387 = vmatpush1.msra.mxu0 0.0
      %388 = vmatprep.subr.mxu0 0.0
      %389 = vmatpush1.msra.mxu0 0.0
      %390 = vmatprep.subr.mxu0 0.0
      %391 = vmatpush1.msra.mxu0 0.0
      %392 = vmatprep.subr.mxu0 0.0
      %393 = vmatpush1.msra.mxu0 0.0
      %394 = vmatprep.subr.mxu0 0.0
      %395 = vmatpush1.msra.mxu0 0.0
      %396 = vmatprep.subr.mxu0 0.0
      %397 = vmatpush1.msra.mxu0 0.0
      %398 = vmatprep.subr.mxu0 0.0
      %399 = vmatpush1.msra.mxu0 0.0
      %400 = vmatprep.subr.mxu0 0.0
      %401 = vmatpush1.msra.mxu0 0.0
      %402 = vmatprep.subr.mxu0 0.0
      %403 = vmatpush1.msra.mxu0 0.0
      %404 = vmatprep.subr.mxu0 0.0
      %405 = vmatpush1.msra.mxu0 0.0
      %406 = vmatprep.subr.mxu0 0.0
      %407 = vmatpush1.msra.mxu0 0.0
      %408 = vmatprep.subr.mxu0 0.0
      %409 = vmatpush1.msra.mxu0 0.0
      %410 = vmatprep.subr.mxu0 0.0
      %411 = vmatpush1.msra.mxu0 %v375
      %412 = vmatprep.subr.mxu0 0.0
      %413 = vmatpush2.msra.mxu0 0.0
      %414 = vmatprep.subr.mxu0 0.0
      %415 = vmatpush2.msra.mxu0 0.0
      %416 = vmatprep.subr.mxu0 0.0
      %417 = vmatpush2.msra.mxu0 0.0
      %418 = vmatprep.subr.mxu0 0.0
      %419 = vmatpush2.msra.mxu0 0.0
      %420 = vmatprep.subr.mxu0 0.0
      %421 = vmatpush2.msra.mxu0 0.0
      %422 = vmatprep.subr.mxu0 0.0
      %423 = vmatpush2.msra.mxu0 0.0
      %424 = vmatprep.subr.mxu0 0.0
      %425 = vmatpush2.msra.mxu0 0.0
      %426 = vmatprep.subr.mxu0 0.0
      %427 = vmatpush2.msra.mxu0 0.0
      %428 = vmatprep.subr.mxu0 0.0
      %429 = vmatpush2.msra.mxu0 0.0
      %430 = vmatprep.subr.mxu0 0.0
      %431 = vmatpush2.msra.mxu0 0.0
      %432 = vmatprep.subr.mxu0 0.0
      %433 = vmatpush2.msra.mxu0 0.0
      %434 = vmatprep.subr.mxu0 0.0
      %435 = vmatpush2.msra.mxu0 0.0
      %436 = vmatprep.subr.mxu0 0.0
      %437 = vmatpush2.msra.mxu0 0.0
      %438 = vmatprep.subr.mxu0 0.0
      %439 = vmatpush2.msra.mxu0 0.0
      %440 = vmatprep.subr.mxu0 0.0
      %441 = vmatpush2.msra.mxu0 0.0
      %442 = vmatprep.subr.mxu0 0.0
      %443 = vmatpush2.msra.mxu0 0.0
      %444 = vmatprep.mubr.f32.mxu0 0.0
      %445 = vmatmul.mubr.f32.gmra.mxu0 %v378
      %v446 = vpop.f32.mrf.mxu0
      %v447 = vadd.f32 0.0, %v446
      %v448 = vpop.f32.mrf.mxu0
      %449 = vdwg.mxu0
      %v450 = vrcp.pop %v373
      %v451 = vmul.f32 %v447, %v450
      %452 = vrot.lane.b32.xlu0 %v118, 112
      %v453 = vpop.permute.xlu0 %452
      %454 = vrot.lane.b32.xlu0 %v117, 80
      %v455 = vpop.permute.xlu0 %454
      %v456 = vsel %vm122, %v453, 0
      %v458 = vsel %vm122, %v455, 0
      %460 = vmatprep.subr.mxu0 0.0
      %461 = vmatpush1.xpose.msra.mxu0 0.0
      %462 = vmatprep.subr.mxu0 0.0
      %463 = vmatpush1.xpose.msra.mxu0 0.0
      %464 = vmatprep.subr.mxu0 0.0
      %465 = vmatpush1.xpose.msra.mxu0 0.0
      %466 = vmatprep.subr.mxu0 0.0
      %467 = vmatpush1.xpose.msra.mxu0 0.0
      %468 = vmatprep.subr.mxu0 0.0
      %469 = vmatpush1.xpose.msra.mxu0 0.0
      %470 = vmatprep.subr.mxu0 0.0
      %471 = vmatpush1.xpose.msra.mxu0 0.0
      %472 = vmatprep.subr.mxu0 0.0
      %473 = vmatpush1.xpose.msra.mxu0 0.0
      %474 = vmatprep.subr.mxu0 0.0
      %475 = vmatpush1.xpose.msra.mxu0 0.0
      %476 = vmatprep.subr.mxu0 0.0
      %477 = vmatpush1.xpose.msra.mxu0 0.0
      %478 = vmatprep.subr.mxu0 0.0
      %479 = vmatpush1.xpose.msra.mxu0 0.0
      %480 = vmatprep.subr.mxu0 0.0
      %481 = vmatpush1.xpose.msra.mxu0 0.0
      %482 = vmatprep.subr.mxu0 0.0
      %483 = vmatpush1.xpose.msra.mxu0 0.0
      %484 = vmatprep.subr.mxu0 0.0
      %485 = vmatpush1.xpose.msra.mxu0 0.0
      %486 = vmatprep.subr.mxu0 0.0
      %487 = vmatpush1.xpose.msra.mxu0 0.0
      %488 = vmatprep.subr.mxu0 0.0
      %489 = vmatpush1.xpose.msra.mxu0 0.0
      %490 = vmatprep.subr.mxu0 0.0
      %491 = vmatpush1.xpose.msra.mxu0 %v458
      %492 = vmatprep.subr.mxu0 0.0
      %493 = vmatpush2.xpose.msra.mxu0 0.0
      %494 = vmatprep.subr.mxu0 0.0
      %495 = vmatpush2.xpose.msra.mxu0 0.0
      %496 = vmatprep.subr.mxu0 0.0
      %497 = vmatpush2.xpose.msra.mxu0 0.0
      %498 = vmatprep.subr.mxu0 0.0
      %499 = vmatpush2.xpose.msra.mxu0 0.0
      %500 = vmatprep.subr.mxu0 0.0
      %501 = vmatpush2.xpose.msra.mxu0 0.0
      %502 = vmatprep.subr.mxu0 0.0
      %503 = vmatpush2.xpose.msra.mxu0 0.0
      %504 = vmatprep.subr.mxu0 0.0
      %505 = vmatpush2.xpose.msra.mxu0 0.0
      %506 = vmatprep.subr.mxu0 0.0
      %507 = vmatpush2.xpose.msra.mxu0 0.0
      %508 = vmatprep.subr.mxu0 0.0
      %509 = vmatpush2.xpose.msra.mxu0 0.0
      %510 = vmatprep.subr.mxu0 0.0
      %511 = vmatpush2.xpose.msra.mxu0 0.0
      %512 = vmatprep.subr.mxu0 0.0
      %513 = vmatpush2.xpose.msra.mxu0 0.0
      %514 = vmatprep.subr.mxu0 0.0
      %515 = vmatpush2.xpose.msra.mxu0 0.0
      %516 = vmatprep.subr.mxu0 0.0
      %517 = vmatpush2.xpose.msra.mxu0 0.0
      %518 = vmatprep.subr.mxu0 0.0
      %519 = vmatpush2.xpose.msra.mxu0 0.0
      %520 = vmatprep.subr.mxu0 0.0
      %521 = vmatpush2.xpose.msra.mxu0 0.0
      %522 = vmatprep.subr.mxu0 0.0
      %523 = vmatpush2.xpose.msra.mxu0 0.0
      %524 = vmatprep.mubr.f32.mxu0 0.0
      %525 = vmatmul.mubr.f32.gmra.mxu0 %v456
      %v526 = vpop.f32.mrf.mxu0
      %v527 = vadd.f32 0.0, %v526
      %v528 = vpop.f32.mrf.mxu0
      %529 = vdwg.mxu0
      %v530 = vsel %vm116, %v527, -inf
      %v531 = vsel %vm122, %v530, -inf
      %532 = vmax.xlane.f32.xlu0 %v531
      %v533 = vpop.xlane.xlu0 %532
      %v534 = vsub.f32 %v530, %v533
      %v535 = vmul.f32 %v534, 1.442695
      %v536 = vpow.pop %v535
      %v537 = vsel %vm122, %v536, 0.0
      %538 = vadd.xlane.f32.xlu0 %v537
      %v539 = vpop.xlane.xlu0 %538
      %540 = vrot.lane.b32.xlu0 %v117, 48
      %v541 = vpop.permute.xlu0 %540
      %v544 = vsel %vm122, %v536, 0
      %546 = vmatprep.subr.mxu0 0.0
      %547 = vmatpush1.msra.mxu0 0.0
      %548 = vmatprep.subr.mxu0 0.0
      %549 = vmatpush1.msra.mxu0 0.0
      %550 = vmatprep.subr.mxu0 0.0
      %551 = vmatpush1.msra.mxu0 0.0
      %552 = vmatprep.subr.mxu0 0.0
      %553 = vmatpush1.msra.mxu0 0.0
      %554 = vmatprep.subr.mxu0 0.0
      %555 = vmatpush1.msra.mxu0 0.0
      %556 = vmatprep.subr.mxu0 0.0
      %557 = vmatpush1.msra.mxu0 0.0
      %558 = vmatprep.subr.mxu0 0.0
      %559 = vmatpush1.msra.mxu0 0.0
      %560 = vmatprep.subr.mxu0 0.0
      %561 = vmatpush1.msra.mxu0 0.0
      %562 = vmatprep.subr.mxu0 0.0
      %563 = vmatpush1.msra.mxu0 0.0
      %564 = vmatprep.subr.mxu0 0.0
      %565 = vmatpush1.msra.mxu0 0.0
      %566 = vmatprep.subr.mxu0 0.0
      %567 = vmatpush1.msra.mxu0 0.0
      %568 = vmatprep.subr.mxu0 0.0
      %569 = vmatpush1.msra.mxu0 0.0
      %570 = vmatprep.subr.mxu0 0.0
      %571 = vmatpush1.msra.mxu0 0.0
      %572 = vmatprep.subr.mxu0 0.0
      %573 = vmatpush1.msra.mxu0 0.0
      %574 = vmatprep.subr.mxu0 0.0
      %575 = vmatpush1.msra.mxu0 0.0
      %576 = vmatprep.subr.mxu0 0.0
      %577 = vmatpush1.msra.mxu0 %v541
      %578 = vmatprep.subr.mxu0 0.0
      %579 = vmatpush2.msra.mxu0 0.0
      %580 = vmatprep.subr.mxu0 0.0
      %581 = vmatpush2.msra.mxu0 0.0
      %582 = vmatprep.subr.mxu0 0.0
      %583 = vmatpush2.msra.mxu0 0.0
      %584 = vmatprep.subr.mxu0 0.0
      %585 = vmatpush2.msra.mxu0 0.0
      %586 = vmatprep.subr.mxu0 0.0
      %587 = vmatpush2.msra.mxu0 0.0
      %588 = vmatprep.subr.mxu0 0.0
      %589 = vmatpush2.msra.mxu0 0.0
      %590 = vmatprep.subr.mxu0 0.0
      %591 = vmatpush2.msra.mxu0 0.0
      %592 = vmatprep.subr.mxu0 0.0
      %593 = vmatpush2.msra.mxu0 0.0
      %594 = vmatprep.subr.mxu0 0.0
      %595 = vmatpush2.msra.mxu0 0.0
      %596 = vmatprep.subr.mxu0 0.0
      %597 = vmatpush2.msra.mxu0 0.0
      %598 = vmatprep.subr.mxu0 0.0
      %599 = vmatpush2.msra.mxu0 0.0
      %600 = vmatprep.subr.mxu0 0.0
      %601 = vmatpush2.msra.mxu0 0.0
      %602 = vmatprep.subr.mxu0 0.0
      %603 = vmatpush2.msra.mxu0 0.0
      %604 = vmatprep.subr.mxu0 0.0
      %605 = vmatpush2.msra.mxu0 0.0
      %606 = vmatprep.subr.mxu0 0.0
      %607 = vmatpush2.msra.mxu0 0.0
      %608 = vmatprep.subr.mxu0 0.0
      %609 = vmatpush2.msra.mxu0 0.0
      %610 = vmatprep.mubr.f32.mxu0 0.0
      %611 = vmatmul.mubr.f32.gmra.mxu0 %v544
      %v612 = vpop.f32.mrf.mxu0
      %v613 = vadd.f32 0.0, %v612
      %v614 = vpop.f32.mrf.mxu0
      %615 = vdwg.mxu0
      %v616 = vrcp.pop %v539
      %v617 = vmul.f32 %v613, %v616
      %618 = vrot.lane.b32.xlu0 %v118, 104
      %v619 = vpop.permute.xlu0 %618
      %620 = vrot.lane.b32.xlu0 %v117, 72
      %v621 = vpop.permute.xlu0 %620
      %v622 = vsel %vm122, %v619, 0
      %v624 = vsel %vm122, %v621, 0
      %626 = vmatprep.subr.mxu0 0.0
      %627 = vmatpush1.xpose.msra.mxu0 0.0
      %628 = vmatprep.subr.mxu0 0.0
      %629 = vmatpush1.xpose.msra.mxu0 0.0
      %630 = vmatprep.subr.mxu0 0.0
      %631 = vmatpush1.xpose.msra.mxu0 0.0
      %632 = vmatprep.subr.mxu0 0.0
      %633 = vmatpush1.xpose.msra.mxu0 0.0
      %634 = vmatprep.subr.mxu0 0.0
      %635 = vmatpush1.xpose.msra.mxu0 0.0
      %636 = vmatprep.subr.mxu0 0.0
      %637 = vmatpush1.xpose.msra.mxu0 0.0
      %638 = vmatprep.subr.mxu0 0.0
      %639 = vmatpush1.xpose.msra.mxu0 0.0
      %640 = vmatprep.subr.mxu0 0.0
      %641 = vmatpush1.xpose.msra.mxu0 0.0
      %642 = vmatprep.subr.mxu0 0.0
      %643 = vmatpush1.xpose.msra.mxu0 0.0
      %644 = vmatprep.subr.mxu0 0.0
      %645 = vmatpush1.xpose.msra.mxu0 0.0
      %646 = vmatprep.subr.mxu0 0.0
      %647 = vmatpush1.xpose.msra.mxu0 0.0
      %648 = vmatprep.subr.mxu0 0.0
      %649 = vmatpush1.xpose.msra.mxu0 0.0
      %650 = vmatprep.subr.mxu0 0.0
      %651 = vmatpush1.xpose.msra.mxu0 0.0
      %652 = vmatprep.subr.mxu0 0.0
      %653 = vmatpush1.xpose.msra.mxu0 0.0
      %654 = vmatprep.subr.mxu0 0.0
      %655 = vmatpush1.xpose.msra.mxu0 0.0
      %656 = vmatprep.subr.mxu0 0.0
      %657 = vmatpush1.xpose.msra.mxu0 %v624
      %658 = vmatprep.subr.mxu0 0.0
      %659 = vmatpush2.xpose.msra.mxu0 0.0
      %660 = vmatprep.subr.mxu0 0.0
      %661 = vmatpush2.xpose.msra.mxu0 0.0
      %662 = vmatprep.subr.mxu0 0.0
      %663 = vmatpush2.xpose.msra.mxu0 0.0
      %664 = vmatprep.subr.mxu0 0.0
      %665 = vmatpush2.xpose.msra.mxu0 0.0
      %666 = vmatprep.subr.mxu0 0.0
      %667 = vmatpush2.xpose.msra.mxu0 0.0
      %668 = vmatprep.subr.mxu0 0.0
      %669 = vmatpush2.xpose.msra.mxu0 0.0
      %670 = vmatprep.subr.mxu0 0.0
      %671 = vmatpush2.xpose.msra.mxu0 0.0
      %672 = vmatprep.subr.mxu0 0.0
      %673 = vmatpush2.xpose.msra.mxu0 0.0
      %674 = vmatprep.subr.mxu0 0.0
      %675 = vmatpush2.xpose.msra.mxu0 0.0
      %676 = vmatprep.subr.mxu0 0.0
      %677 = vmatpush2.xpose.msra.mxu0 0.0
      %678 = vmatprep.subr.mxu0 0.0
      %679 = vmatpush2.xpose.msra.mxu0 0.0
      %680 = vmatprep.subr.mxu0 0.0
      %681 = vmatpush2.xpose.msra.mxu0 0.0
      %682 = vmatprep.subr.mxu0 0.0
      %683 = vmatpush2.xpose.msra.mxu0 0.0
      %684 = vmatprep.subr.mxu0 0.0
      %685 = vmatpush2.xpose.msra.mxu0 0.0
      %686 = vmatprep.subr.mxu0 0.0
      %687 = vmatpush2.xpose.msra.mxu0 0.0
      %688 = vmatprep.subr.mxu0 0.0
      %689 = vmatpush2.xpose.msra.mxu0 0.0
      %690 = vmatprep.mubr.f32.mxu0 0.0
      %691 = vmatmul.mubr.f32.gmra.mxu0 %v622
      %v692 = vpop.f32.mrf.mxu0
      %v693 = vadd.f32 0.0, %v692
      %v694 = vpop.f32.mrf.mxu0
      %695 = vdwg.mxu0
      %v696 = vsel %vm116, %v693, -inf
      %v697 = vsel %vm122, %v696, -inf
      %698 = vmax.xlane.f32.xlu0 %v697
      %v699 = vpop.xlane.xlu0 %698
      %v700 = vsub.f32 %v696, %v699
      %v701 = vmul.f32 %v700, 1.442695
      %v702 = vpow.pop %v701
      %v703 = vsel %vm122, %v702, 0.0
      %704 = vadd.xlane.f32.xlu0 %v703
      %v705 = vpop.xlane.xlu0 %704
      %706 = vrot.lane.b32.xlu0 %v117, 40
      %v707 = vpop.permute.xlu0 %706
      %v710 = vsel %vm122, %v702, 0
      %712 = vmatprep.subr.mxu0 0.0
      %713 = vmatpush1.msra.mxu0 0.0
      %714 = vmatprep.subr.mxu0 0.0
      %715 = vmatpush1.msra.mxu0 0.0
      %716 = vmatprep.subr.mxu0 0.0
      %717 = vmatpush1.msra.mxu0 0.0
      %718 = vmatprep.subr.mxu0 0.0
      %719 = vmatpush1.msra.mxu0 0.0
      %720 = vmatprep.subr.mxu0 0.0
      %721 = vmatpush1.msra.mxu0 0.0
      %722 = vmatprep.subr.mxu0 0.0
      %723 = vmatpush1.msra.mxu0 0.0
      %724 = vmatprep.subr.mxu0 0.0
      %725 = vmatpush1.msra.mxu0 0.0
      %726 = vmatprep.subr.mxu0 0.0
      %727 = vmatpush1.msra.mxu0 0.0
      %728 = vmatprep.subr.mxu0 0.0
      %729 = vmatpush1.msra.mxu0 0.0
      %730 = vmatprep.subr.mxu0 0.0
      %731 = vmatpush1.msra.mxu0 0.0
      %732 = vmatprep.subr.mxu0 0.0
      %733 = vmatpush1.msra.mxu0 0.0
      %734 = vmatprep.subr.mxu0 0.0
      %735 = vmatpush1.msra.mxu0 0.0
      %736 = vmatprep.subr.mxu0 0.0
      %737 = vmatpush1.msra.mxu0 0.0
      %738 = vmatprep.subr.mxu0 0.0
      %739 = vmatpush1.msra.mxu0 0.0
      %740 = vmatprep.subr.mxu0 0.0
      %741 = vmatpush1.msra.mxu0 0.0
      %742 = vmatprep.subr.mxu0 0.0
      %743 = vmatpush1.msra.mxu0 %v707
      %744 = vmatprep.subr.mxu0 0.0
      %745 = vmatpush2.msra.mxu0 0.0
      %746 = vmatprep.subr.mxu0 0.0
      %747 = vmatpush2.msra.mxu0 0.0
      %748 = vmatprep.subr.mxu0 0.0
      %749 = vmatpush2.msra.mxu0 0.0
      %750 = vmatprep.subr.mxu0 0.0
      %751 = vmatpush2.msra.mxu0 0.0
      %752 = vmatprep.subr.mxu0 0.0
      %753 = vmatpush2.msra.mxu0 0.0
      %754 = vmatprep.subr.mxu0 0.0
      %755 = vmatpush2.msra.mxu0 0.0
      %756 = vmatprep.subr.mxu0 0.0
      %757 = vmatpush2.msra.mxu0 0.0
      %758 = vmatprep.subr.mxu0 0.0
      %759 = vmatpush2.msra.mxu0 0.0
      %760 = vmatprep.subr.mxu0 0.0
      %761 = vmatpush2.msra.mxu0 0.0
      %762 = vmatprep.subr.mxu0 0.0
      %763 = vmatpush2.msra.mxu0 0.0
      %764 = vmatprep.subr.mxu0 0.0
      %765 = vmatpush2.msra.mxu0 0.0
      %766 = vmatprep.subr.mxu0 0.0
      %767 = vmatpush2.msra.mxu0 0.0
      %768 = vmatprep.subr.mxu0 0.0
      %769 = vmatpush2.msra.mxu0 0.0
      %770 = vmatprep.subr.mxu0 0.0
      %771 = vmatpush2.msra.mxu0 0.0
      %772 = vmatprep.subr.mxu0 0.0
      %773 = vmatpush2.msra.mxu0 0.0
      %774 = vmatprep.subr.mxu0 0.0
      %775 = vmatpush2.msra.mxu0 0.0
      %776 = vmatprep.mubr.f32.mxu0 0.0
      %777 = vmatmul.mubr.f32.gmra.mxu0 %v710
      %v778 = vpop.f32.mrf.mxu0
      %v779 = vadd.f32 0.0, %v778
      %v780 = vpop.f32.mrf.mxu0
      %781 = vdwg.mxu0
      %v782 = vrcp.pop %v705
      %v783 = vmul.f32 %v779, %v782
      %785 = vrot.lane.b32.xlu0 %v451, 8
      %v786 = vpop.permute.xlu0 %785
      %789 = vrot.lane.b32.xlu0 %v617, 16
      %v790 = vpop.permute.xlu0 %789
      %793 = vrot.lane.b32.xlu0 %v783, 24
      %v794 = vpop.permute.xlu0 %793
      %v796 = vsel %vm122, %v285, %v786
      %vm797 = vcmask 130048
      %v798 = vsel %vm797, %v796, %v790
      %vm799 = vcmask 195584
      %v800 = vsel %vm799, %v798, %v794
      %vm801 = vcmask 261120
      %802 = vst.msk [vmem:[%s111] sm:$0xff] %vm801, %v800
      %p803 = scmp.lt.s32.totalorder %s12, 1
      %s804 = scalar_select %p803, %s12, 1
      %s805 = smul.addr %s804, 8
      %s806 = scalar_lea.vmem %s1, %s805
      // Predicated region
      $region25: #{block_forward.9} parent=23 // pred_check
        %p807 = pneg %p56
      $region26: #{block_forward.9} parent=23 // pred_check_branch
        %809 = sbr.rel (%p807) target = $region28
      $region27: #{block_forward.9} parent=23 // pred_region
        _
      $region28: #{block_forward.9} parent=23 // pred_fallthru
        _
    $region24: #{block_forward.9} parent=5 // pred_fallthru
      _
    %p810 = scmp.le.s32.totalorder 2, %s7
    // Predicated region
    $region29: #{block_forward.9} parent=5 // pred_check
      %p811 = pneg %p810
    $region30: #{block_forward.9} parent=5 // pred_check_branch
      %813 = sbr.rel (%p811) target = $region32
    $region31: #{block_forward.9} parent=5 // pred_region
      %s814 = ssub.s32 %s7, 2
      // Predicated region
      $region33: #{block_forward.9} parent=31 // pred_check
        %p815 = pneg %p62
      $region34: #{block_forward.9} parent=31 // pred_check_branch
        %817 = sbr.rel (%p815) target = $region36
      $region35: #{block_forward.9} parent=31 // pred_region
        %p818 = scmp.lt.s32.totalorder %s13, 1
        %s819 = scalar_select %p818, %s13, 1
        %s820 = smul.addr %s819, 8
        %s821 = scalar_lea.vmem %s1, %s820
      $region36: #{block_forward.9} parent=31 // pred_fallthru
        _
    $region32: #{block_forward.9} parent=5 // pred_fallthru
      _
  $region6: #{block_forward.9} parent=0 // loop_footer
    %s11 = sadd.s32 1, %s7
  $region7: #{block_forward.9} parent=0 // loop_footer_branch
    %6 = sbr.rel target = $region3
  $region8: #{block_forward.9} parent=0 // loop_exit
    _

// kernel: block_forward.12
$region0: #{block_forward.12}
  #allocation0 [shape = 'u32[]', space=smem, size = 0x4, offset = 0x4, fixed_abs, tag = 'smem constant byte address 0x4 - core index']
  #allocation1 [shape = 'u32[144,128]{1,0:T(1,128)}', space=vmem, size = 0x12000, scoped, tag = 'internal scratch']
  #allocation2 [shape = 'f32[16,128]{1,0:T(8,128)}', space=vmem, size = 0x2000, scoped, tag = 'scratch operand']
  %s0 = inlined_call_operand.vmem [shape: f32[16,32], index: 0, kind: input, shape index: {}]
  %s1 = inlined_call_operand.vmem [shape: f32[32,128], index: 1, kind: input, shape index: {}]
  %s2 = inlined_call_operand.vmem [shape: f32[1,128], index: 2, kind: input, shape index: {}]
  %s3 = inlined_call_operand.vmem [shape: f32[16,128], index: 3, kind: output, shape index: {}]
  %s4 = sld [smem:[#allocation0]]
  $region30: #{block_forward.12} parent=0
    _
  %s6 = ssub.s32 1, %s4
  %s7 = scalar_select 0, %s6, %s4
  // Predicated region
  $region2: #{block_forward.12} parent=0 // pred_check
    _
  $region3: #{block_forward.12} parent=0 // pred_check_branch
    %9 = sbr.rel (0) target = $region5
  $region4: #{block_forward.12} parent=0 // pred_region
    _
  $region5: #{block_forward.12} parent=0 // pred_fallthru
    _
  // Predicated region
  $region6: #{block_forward.12} parent=0 // pred_check
    _
  $region7: #{block_forward.12} parent=0 // pred_check_branch
    %11 = sbr.rel (0) target = $region9
  $region8: #{block_forward.12} parent=0 // pred_region
    _
  $region9: #{block_forward.12} parent=0 // pred_fallthru
    _
  // Predicated region
  $region10: #{block_forward.12} parent=0 // pred_check
    _
  $region11: #{block_forward.12} parent=0 // pred_check_branch
    %13 = sbr.rel (0) target = $region13
  $region12: #{block_forward.12} parent=0 // pred_region
    _
  $region13: #{block_forward.12} parent=0 // pred_fallthru
    _
  %p14 = scmp.eq.s32.totalorder 0, 0
  // Predicated region
  $region14: #{block_forward.12} parent=0 // pred_check
    %p15 = pneg %p14
  $region15: #{block_forward.12} parent=0 // pred_check_branch
    %17 = sbr.rel (%p15) target = $region17
  $region16: #{block_forward.12} parent=0 // pred_region
    %18 = vst [vmem:[#allocation2] sm:$0xff] 0.0
    %19 = vst [vmem:[#allocation2 + $0x8] sm:$0xff] 0.0
  $region17: #{block_forward.12} parent=0 // pred_fallthru
    _
  %v20 = vld [vmem:[#allocation2] sm:$0xff]
  %v21 = vld [vmem:[#allocation2 + $0x8] sm:$0xff]
  %v22 = vld [vmem:[%s0] sm:$0xff]
  %v23 = vld [vmem:[%s0 + $0x8] sm:$0xff]
  %v24 = vld [vmem:[%s1] sm:$0xff]
  %v25 = vld [vmem:[%s1 + $0x8] sm:$0xff]
  %v26 = vld [vmem:[%s1 + $0x10] sm:$0xff]
  %v27 = vld [vmem:[%s1 + $0x18] sm:$0xff]
  %vm28 = vcmask 261120
  %v30 = vsel %vm28, %v22, 0
  %v33 = vsel %vm28, %v23, 0
  %35 = vmatprep.subr.mxu0 0.0
  %36 = vmatpush1.msra.mxu0 0.0
  %37 = vmatprep.subr.mxu0 0.0
  %38 = vmatpush1.msra.mxu0 0.0
  %39 = vmatprep.subr.mxu0 0.0
  %40 = vmatpush1.msra.mxu0 0.0
  %41 = vmatprep.subr.mxu0 0.0
  %42 = vmatpush1.msra.mxu0 0.0
  %43 = vmatprep.subr.mxu0 0.0
  %44 = vmatpush1.msra.mxu0 0.0
  %45 = vmatprep.subr.mxu0 0.0
  %46 = vmatpush1.msra.mxu0 0.0
  %47 = vmatprep.subr.mxu0 0.0
  %48 = vmatpush1.msra.mxu0 0.0
  %49 = vmatprep.subr.mxu0 0.0
  %50 = vmatpush1.msra.mxu0 0.0
  %51 = vmatprep.subr.mxu0 0.0
  %52 = vmatpush1.msra.mxu0 0.0
  %53 = vmatprep.subr.mxu0 0.0
  %54 = vmatpush1.msra.mxu0 0.0
  %55 = vmatprep.subr.mxu0 0.0
  %56 = vmatpush1.msra.mxu0 0.0
  %57 = vmatprep.subr.mxu0 0.0
  %58 = vmatpush1.msra.mxu0 0.0
  %59 = vmatprep.subr.mxu0 0.0
  %60 = vmatpush1.msra.mxu0 %v27
  %61 = vmatprep.subr.mxu0 0.0
  %62 = vmatpush1.msra.mxu0 %v26
  %63 = vmatprep.subr.mxu0 0.0
  %64 = vmatpush1.msra.mxu0 %v25
  %65 = vmatprep.subr.mxu0 0.0
  %66 = vmatpush1.msra.mxu0 %v24
  %67 = vmatprep.subr.mxu0 0.0
  %68 = vmatpush2.msra.mxu0 0.0
  %69 = vmatprep.subr.mxu0 0.0
  %70 = vmatpush2.msra.mxu0 0.0
  %71 = vmatprep.subr.mxu0 0.0
  %72 = vmatpush2.msra.mxu0 0.0
  %73 = vmatprep.subr.mxu0 0.0
  %74 = vmatpush2.msra.mxu0 0.0
  %75 = vmatprep.subr.mxu0 0.0
  %76 = vmatpush2.msra.mxu0 0.0
  %77 = vmatprep.subr.mxu0 0.0
  %78 = vmatpush2.msra.mxu0 0.0
  %79 = vmatprep.subr.mxu0 0.0
  %80 = vmatpush2.msra.mxu0 0.0
  %81 = vmatprep.subr.mxu0 0.0
  %82 = vmatpush2.msra.mxu0 0.0
  %83 = vmatprep.subr.mxu0 0.0
  %84 = vmatpush2.msra.mxu0 0.0
  %85 = vmatprep.subr.mxu0 0.0
  %86 = vmatpush2.msra.mxu0 0.0
  %87 = vmatprep.subr.mxu0 0.0
  %88 = vmatpush2.msra.mxu0 0.0
  %89 = vmatprep.subr.mxu0 0.0
  %90 = vmatpush2.msra.mxu0 0.0
  %91 = vmatprep.subr.mxu0 0.0
  %92 = vmatpush2.msra.mxu0 0.0
  %93 = vmatprep.subr.mxu0 0.0
  %94 = vmatpush2.msra.mxu0 0.0
  %95 = vmatprep.subr.mxu0 0.0
  %96 = vmatpush2.msra.mxu0 0.0
  %97 = vmatprep.subr.mxu0 0.0
  %98 = vmatpush2.msra.mxu0 0.0
  %99 = vmatprep.mubr.f32.mxu0 0.0
  %100 = vmatmul.mubr.f32.gmra.mxu0 %v30
  %v101 = vpop.f32.mrf.mxu0
  %v102 = vadd.f32 0.0, %v101
  %v103 = vpop.f32.mrf.mxu0
  %104 = vmatprep.mubr.f32.mxu0 0.0
  %105 = vmatmul.mubr.f32.gmra.mxu0 %v33
  %v106 = vpop.f32.mrf.mxu0
  %v107 = vadd.f32 0.0, %v106
  %v108 = vpop.f32.mrf.mxu0
  %109 = vdwg.mxu0
  %v110 = vadd.f32 %v20, %v102
  %v111 = vadd.f32 %v21, %v107
  %112 = vst [vmem:[#allocation2] sm:$0xff] %v110
  %113 = vst [vmem:[#allocation2 + $0x8] sm:$0xff] %v111
  // Predicated region
  $region18: #{block_forward.12} parent=0 // pred_check
    %p114 = pneg %p14
  $region19: #{block_forward.12} parent=0 // pred_check_branch
    %116 = sbr.rel (%p114) target = $region21
  $region20: #{block_forward.12} parent=0 // pred_region
    %v117 = vld [vmem:[#allocation2] sm:$0xff]
    %v118 = vld [vmem:[#allocation2 + $0x8] sm:$0xff]
    %v119 = vld [vmem:[%s2] sm:$0x1]
    %v121 = vlaneseq
    %v122 = vshrl.u32 %v121, 7
    %v123 = vsub.s32 0, %v122
    %v124 = vrot.slane %v119, %v123
    %v126 = vadd.f32 %v117, %v124
    %v127 = vadd.f32 %v118, %v124
    %v128 = vmul.f32 %v126, %v126
    %v129 = vmul.f32 %v127, %v127
    %v130 = vmul.f32 %v126, %v128
    %v131 = vmul.f32 %v127, %v129
    %v132 = vmul.f32 %v130, 0.044715
    %v133 = vmul.f32 %v131, 0.044715
    %v134 = vadd.f32 %v126, %v132
    %v135 = vadd.f32 %v127, %v133
    %v136 = vmul.f32 %v134, 0.7978846
    %v137 = vmul.f32 %v135, 0.7978846
    %v138 = vtanh.pop %v136
    %v139 = vtanh.pop %v137
    %v140 = vadd.f32 %v138, 1.0
    %v141 = vadd.f32 %v139, 1.0
    %v142 = vmul.f32 %v140, 0.5
    %v143 = vmul.f32 %v141, 0.5
    %v144 = vmul.f32 %v126, %v142
    %v145 = vmul.f32 %v127, %v143
    %146 = vst [vmem:[%s3] sm:$0xff] %v144
    %147 = vst [vmem:[%s3 + $0x8] sm:$0xff] %v145
  $region21: #{block_forward.12} parent=0 // pred_fallthru
    _
  // Predicated region
  $region22: #{block_forward.12} parent=0 // pred_check
    _
  $region23: #{block_forward.12} parent=0 // pred_check_branch
    %149 = sbr.rel (0) target = $region25
  $region24: #{block_forward.12} parent=0 // pred_region
    _
  $region25: #{block_forward.12} parent=0 // pred_fallthru
    _
  // Predicated region
  $region26: #{block_forward.12} parent=0 // pred_check
    _
  $region27: #{block_forward.12} parent=0 // pred_check_branch
    %151 = sbr.rel (0) target = $region29
  $region28: #{block_forward.12} parent=0 // pred_region
    _
  $region29: #{block_forward.12} parent=0 // pred_fallthru
    _

// kernel: block_forward.13
$region0: #{block_forward.13}
  #allocation0 [shape = 'u32[]', space=smem, size = 0x4, offset = 0x4, fixed_abs, tag = 'smem constant byte address 0x4 - core index']
  #allocation1 [shape = 'u32[144,128]{1,0:T(1,128)}', space=vmem, size = 0x12000, scoped, tag = 'internal scratch']
  #allocation2 [shape = 'f32[16,32]{1,0:T(8,128)}', space=vmem, size = 0x2000, scoped, tag = 'scratch operand']
  %s0 = inlined_call_operand.vmem [shape: f32[16,128], index: 0, kind: input, shape index: {}]
  %s1 = inlined_call_operand.vmem [shape: f32[128,32], index: 1, kind: input, shape index: {}]
  %s2 = inlined_call_operand.vmem [shape: f32[1,32], index: 2, kind: input, shape index: {}]
  %s3 = inlined_call_operand.vmem [shape: f32[16,32], index: 3, kind: input, shape index: {}]
  %s4 = inlined_call_operand.hbm [shape: f32[16,32], index: 4, kind: output, shape index: {}]
  %s5 = sld [smem:[#allocation0]]
  $region34: #{block_forward.13} parent=0
    _
  %s7 = ssub.s32 1, %s5
  %s8 = scalar_select 0, %s7, %s5
  $region1: #{block_forward.13} parent=0
    #allocation3 [shape = 'u8[8192]{0}', space=vmem, size = 0x2000, scoped, tag = 'output window, operand 0, single buffered']
    #allocation4 [shape = 's32[1]{0}', space=sflag, size = 0x4, scoped, tag = 'scoped memory for block_forward.13']
    %9 = vsyncpa [#allocation4], 0
    // Predicated region
    $region2: #{block_forward.13} parent=1 // pred_check
      _
    $region3: #{block_forward.13} parent=1 // pred_check_branch
      %11 = sbr.rel (0) target = $region5
    $region4: #{block_forward.13} parent=1 // pred_region
      _
    $region5: #{block_forward.13} parent=1 // pred_fallthru
      _
    // Predicated region
    $region6: #{block_forward.13} parent=1 // pred_check
      _
    $region7: #{block_forward.13} parent=1 // pred_check_branch
      %13 = sbr.rel (0) target = $region9
    $region8: #{block_forward.13} parent=1 // pred_region
      _
    $region9: #{block_forward.13} parent=1 // pred_fallthru
      _
    // Predicated region
    $region10: #{block_forward.13} parent=1 // pred_check
      _
    $region11: #{block_forward.13} parent=1 // pred_check_branch
      %15 = sbr.rel (0) target = $region13
    $region12: #{block_forward.13} parent=1 // pred_region
      _
    $region13: #{block_forward.13} parent=1 // pred_fallthru
      _
    // Predicated region
    $region14: #{block_forward.13} parent=1 // pred_check
      _
    $region15: #{block_forward.13} parent=1 // pred_check_branch
      %17 = sbr.rel (0) target = $region17
    $region16: #{block_forward.13} parent=1 // pred_region
      _
    $region17: #{block_forward.13} parent=1 // pred_fallthru
      _
    %p18 = scmp.eq.s32.totalorder 0, 0
    // Predicated region
    $region18: #{block_forward.13} parent=1 // pred_check
      %p19 = pneg %p18
    $region19: #{block_forward.13} parent=1 // pred_check_branch
      %21 = sbr.rel (%p19) target = $region21
    $region20: #{block_forward.13} parent=1 // pred_region
      %vm22 = vcmask 261120
      %23 = vst.msk [vmem:[#allocation2] sm:$0xff] %vm22, 0.0
      %24 = vst.msk [vmem:[#allocation2 + $0x8] sm:$0xff] %vm22, 0.0
    $region21: #{block_forward.13} parent=1 // pred_fallthru
      _
    %v25 = vld [vmem:[#allocation2] sm:$0xff]
    %v26 = vld [vmem:[#allocation2 + $0x8] sm:$0xff]
    %v27 = vld [vmem:[%s0] sm:$0xff]
    %v28 = vld [vmem:[%s0 + $0x8] sm:$0xff]
    %v29 = vld [vmem:[%s1] sm:$0xff]
    %v30 = vld [vmem:[%s1 + $0x8] sm:$0xff]
    %v31 = vld [vmem:[%s1 + $0x10] sm:$0xff]
    %v32 = vld [vmem:[%s1 + $0x18] sm:$0xff]
    %v33 = vld [vmem:[%s1 + $0x20] sm:$0xff]
    %v34 = vld [vmem:[%s1 + $0x28] sm:$0xff]
    %v35 = vld [vmem:[%s1 + $0x30] sm:$0xff]
    %v36 = vld [vmem:[%s1 + $0x38] sm:$0xff]
    %v37 = vld [vmem:[%s1 + $0x40] sm:$0xff]
    %v38 = vld [vmem:[%s1 + $0x48] sm:$0xff]
    %v39 = vld [vmem:[%s1 + $0x50] sm:$0xff]
    %v40 = vld [vmem:[%s1 + $0x58] sm:$0xff]
    %v41 = vld [vmem:[%s1 + $0x60] sm:$0xff]
    %v42 = vld [vmem:[%s1 + $0x68] sm:$0xff]
    %v43 = vld [vmem:[%s1 + $0x70] sm:$0xff]
    %v44 = vld [vmem:[%s1 + $0x78] sm:$0xff]
    %45 = vmatprep.subr.mxu0 0.0
    %46 = vmatpush1.msra.mxu0 %v44
    %47 = vmatprep.subr.mxu0 0.0
    %48 = vmatpush1.msra.mxu0 %v43
    %49 = vmatprep.subr.mxu0 0.0
    %50 = vmatpush1.msra.mxu0 %v42
    %51 = vmatprep.subr.mxu0 0.0
    %52 = vmatpush1.msra.mxu0 %v41
    %53 = vmatprep.subr.mxu0 0.0
    %54 = vmatpush1.msra.mxu0 %v40
    %55 = vmatprep.subr.mxu0 0.0
    %56 = vmatpush1.msra.mxu0 %v39
    %57 = vmatprep.subr.mxu0 0.0
    %58 = vmatpush1.msra.mxu0 %v38
    %59 = vmatprep.subr.mxu0 0.0
    %60 = vmatpush1.msra.mxu0 %v37
    %61 = vmatprep.subr.mxu0 0.0
    %62 = vmatpush1.msra.mxu0 %v36
    %63 = vmatprep.subr.mxu0 0.0
    %64 = vmatpush1.msra.mxu0 %v35
    %65 = vmatprep.subr.mxu0 0.0
    %66 = vmatpush1.msra.mxu0 %v34
    %67 = vmatprep.subr.mxu0 0.0
    %68 = vmatpush1.msra.mxu0 %v33
    %69 = vmatprep.subr.mxu0 0.0
    %70 = vmatpush1.msra.mxu0 %v32
    %71 = vmatprep.subr.mxu0 0.0
    %72 = vmatpush1.msra.mxu0 %v31
    %73 = vmatprep.subr.mxu0 0.0
    %74 = vmatpush1.msra.mxu0 %v30
    %75 = vmatprep.subr.mxu0 0.0
    %76 = vmatpush1.msra.mxu0 %v29
    %77 = vmatprep.subr.mxu0 0.0
    %78 = vmatpush2.msra.mxu0 0.0
    %79 = vmatprep.subr.mxu0 0.0
    %80 = vmatpush2.msra.mxu0 0.0
    %81 = vmatprep.subr.mxu0 0.0
    %82 = vmatpush2.msra.mxu0 0.0
    %83 = vmatprep.subr.mxu0 0.0
    %84 = vmatpush2.msra.mxu0 0.0
    %85 = vmatprep.subr.mxu0 0.0
    %86 = vmatpush2.msra.mxu0 0.0
    %87 = vmatprep.subr.mxu0 0.0
    %88 = vmatpush2.msra.mxu0 0.0
    %89 = vmatprep.subr.mxu0 0.0
    %90 = vmatpush2.msra.mxu0 0.0
    %91 = vmatprep.subr.mxu0 0.0
    %92 = vmatpush2.msra.mxu0 0.0
    %93 = vmatprep.subr.mxu0 0.0
    %94 = vmatpush2.msra.mxu0 0.0
    %95 = vmatprep.subr.mxu0 0.0
    %96 = vmatpush2.msra.mxu0 0.0
    %97 = vmatprep.subr.mxu0 0.0
    %98 = vmatpush2.msra.mxu0 0.0
    %99 = vmatprep.subr.mxu0 0.0
    %100 = vmatpush2.msra.mxu0 0.0
    %101 = vmatprep.subr.mxu0 0.0
    %102 = vmatpush2.msra.mxu0 0.0
    %103 = vmatprep.subr.mxu0 0.0
    %104 = vmatpush2.msra.mxu0 0.0
    %105 = vmatprep.subr.mxu0 0.0
    %106 = vmatpush2.msra.mxu0 0.0
    %107 = vmatprep.subr.mxu0 0.0
    %108 = vmatpush2.msra.mxu0 0.0
    %109 = vmatprep.mubr.f32.mxu0 0.0
    %110 = vmatmul.mubr.f32.gmra.mxu0 %v27
    %v111 = vpop.f32.mrf.mxu0
    %v112 = vadd.f32 0.0, %v111
    %v113 = vpop.f32.mrf.mxu0
    %114 = vmatprep.mubr.f32.mxu0 0.0
    %115 = vmatmul.mubr.f32.gmra.mxu0 %v28
    %v116 = vpop.f32.mrf.mxu0
    %v117 = vadd.f32 0.0, %v116
    %v118 = vpop.f32.mrf.mxu0
    %119 = vdwg.mxu0
    %v120 = vadd.f32 %v25, %v112
    %v121 = vadd.f32 %v26, %v117
    %vm122 = vcmask 261120
    %123 = vst.msk [vmem:[#allocation2] sm:$0xff] %vm122, %v120
    %124 = vst.msk [vmem:[#allocation2 + $0x8] sm:$0xff] %vm122, %v121
    // Predicated region
    $region22: #{block_forward.13} parent=1 // pred_check
      %p125 = pneg %p18
    $region23: #{block_forward.13} parent=1 // pred_check_branch
      %127 = sbr.rel (%p125) target = $region25
    $region24: #{block_forward.13} parent=1 // pred_region
      %v128 = vld [vmem:[#allocation2] sm:$0xff]
      %v129 = vld [vmem:[#allocation2 + $0x8] sm:$0xff]
      %v130 = vld [vmem:[%s2] sm:$0x1]
      %v132 = vlaneseq
      %v133 = vshrl.u32 %v132, 7
      %v134 = vsub.s32 0, %v133
      %v135 = vrot.slane %v130, %v134
      %v137 = vadd.f32 %v128, %v135
      %v138 = vadd.f32 %v129, %v135
      %v139 = vld [vmem:[%s3] sm:$0xff]
      %v140 = vld [vmem:[%s3 + $0x8] sm:$0xff]
      %v141 = vadd.f32 %v137, %v139
      %v142 = vadd.f32 %v138, %v140
      %143 = vst.msk [vmem:[#allocation3] sm:$0xff] %vm122, %v141
      %144 = vst.msk [vmem:[#allocation3 + $0x8] sm:$0xff] %vm122, %v142
    $region25: #{block_forward.13} parent=1 // pred_fallthru
      _
    // Predicated region
    $region26: #{block_forward.13} parent=1 // pred_check
      _
    $region27: #{block_forward.13} parent=1 // pred_check_branch
      %146 = sbr.rel (0) target = $region29
    $region28: #{block_forward.13} parent=1 // pred_region
      %s148 = ssub.s32 256, 256
      %149 = vsyncadd [#allocation4], %s148
      %s150 = sshll.u32 [#allocation3], 4
      %s151 = int_to_ptr.vmem [resolvable:$true] %s150
      %156 = dma.vmem_to_hbm [thread:$0]  %s151, 256, %s4, [#allocation4], 128, 128, 8
    $region29: #{block_forward.13} parent=1 // pred_fallthru
      _
    // Predicated region
    $region30: #{block_forward.13} parent=1 // pred_check
      _
    $region31: #{block_forward.13} parent=1 // pred_check_branch
      %158 = sbr.rel (0) target = $region33
    $region32: #{block_forward.13} parent=1 // pred_region
      %159 = dma.done [#allocation4], 256
    $region33: #{block_forward.13} parent=1 // pred_fallthru
      _
    %160 = vsyncpa [#allocation4], 1

</llo_original>
